<compile_context>
chip_gen: v7x
topology: tpu7x:2x2x1
jax: 0.10.0
libtpu: 0.0.40
codegen_flags: <defaults>
</compile_context>

<pallas_src>
import functools

import jax
import jax.numpy as jnp
import numpy as np
from jax import lax
from jax.experimental import pallas as pl
from jax.experimental.pallas import tpu as pltpu

LANE = 128  # every feature / hidden / head dim is zero-padded to one lane tile


# ---------------------------------------------------------------------------
# Fused kernel: timestep encoder -> patient RNN -> predictor heads
# ---------------------------------------------------------------------------
def _fused_kernel(dem_ref, x1_ref, x2_ref, x3_ref, perm_ref,
                  w1_ref, w2_ref, w3_ref, b_ts_ref,
                  w_ih_dem_ref, w_ih_ts_ref, w_hh_ref, b_h_ref,
                  w_hd_ref, b_hd_ref,
                  ts_out_ref, patient_ref, heads_ref):
    L, N, _ = patient_ref.shape

    # 1) Timestep encoder: one small-K matmul per table.  Each pre-packed
    #    weight routes its H output columns into a disjoint lane block of the
    #    shared (N*L, 128) slab, so the per-table concat is free.
    ts = jnp.dot(x1_ref[...].astype(jnp.bfloat16), w1_ref[...],
                 preferred_element_type=jnp.float32)
    ts = ts + jnp.dot(x2_ref[...].astype(jnp.bfloat16), w2_ref[...],
                      preferred_element_type=jnp.float32)
    ts = ts + jnp.dot(x3_ref[...].astype(jnp.bfloat16), w3_ref[...],
                      preferred_element_type=jnp.float32)
    ts = jnp.maximum(ts + b_ts_ref[...], 0.0)       # (N*L, 128) f32, batch-major
    ts_bf = ts.astype(jnp.bfloat16)
    ts_out_ref[...] = ts_bf                          # lane-dense bf16 store

    # 2) Batch-major -> time-major reorder as a tiny permutation matmul on the
    #    MXU (exact: every output row selects exactly one bf16 value), then the
    #    input->hidden contribution for ALL timesteps in one batched MXU pass
    #    plus the time-invariant demographics contribution and bias.
    ts_tm = jnp.dot(perm_ref[...], ts_bf, preferred_element_type=jnp.float32)
    pre_x = jnp.dot(ts_tm.astype(jnp.bfloat16), w_ih_ts_ref[...],
                    preferred_element_type=jnp.float32)              # (L*N, 128)
    pre_c = jnp.dot(dem_ref[...].astype(jnp.bfloat16), w_ih_dem_ref[...],
                    preferred_element_type=jnp.float32) + b_h_ref[...]   # (N, 128)

    # 3) Sequential RNN over time: only h @ W_hh sits on the serial critical
    #    path.  L is tiny and static -> full Python unroll (LLO visibility).
    w_hh = w_hh_ref[...]
    h = jnp.zeros((N, LANE), jnp.float32)
    for t in range(L):
        pre = pre_x[t * N:(t + 1) * N, :] + pre_c
        pre = pre + jnp.dot(h.astype(jnp.bfloat16), w_hh,
                            preferred_element_type=jnp.float32)
        h = jnp.tanh(pre)                            # padded lanes stay exactly 0
        patient_ref[t] = h                           # dense (N, 128) store

    # 4) Merged predictor heads ([mortality | los | 0...]) on the final state.
    heads_ref[...] = jnp.dot(h.astype(jnp.bfloat16), w_hd_ref[...],
                             preferred_element_type=jnp.float32) + b_hd_ref[...]


# ---------------------------------------------------------------------------
# One-time weight prepacking (hoisted out of the per-call forward)
# ---------------------------------------------------------------------------
def prepack_params(params, dem_dim):
    H = int(params["timestep"][0][0].shape[1])
    n_tables = len(params["timestep"])
    w_ih, w_hh, b_h = params["patient"]
    wm, bm, wl, bl = params["predictor"]
    Hp = int(w_hh.shape[0])
    Km, Kl = int(wm.shape[1]), int(wl.shape[1])
    assert n_tables * H <= LANE and Hp <= LANE and Km + Kl <= LANE
    assert dem_dim <= LANE

    # per-table encoder weights: columns land at lane offset i*H
    w_enc = []
    b_ts = np.zeros((1, LANE), np.float32)
    for i, (w, b) in enumerate(params["timestep"]):
        c = int(w.shape[0])
        we = np.zeros((c, LANE), np.float32)
        we[:, i * H:(i + 1) * H] = np.asarray(w)
        b_ts[0, i * H:(i + 1) * H] = np.asarray(b)
        w_enc.append(jnp.asarray(we, jnp.bfloat16))

    # RNN weights: W_ih split into (dem-part, timestep-part); zero padding
    # everywhere so padded hidden lanes never feed back into real lanes.
    w_ih_np = np.asarray(w_ih)
    w_ih_dem = np.zeros((dem_dim, LANE), np.float32)
    w_ih_dem[:, :Hp] = w_ih_np[:dem_dim]
    w_ih_ts = np.zeros((LANE, LANE), np.float32)
    w_ih_ts[:n_tables * H, :Hp] = w_ih_np[dem_dim:]
    w_hh_p = np.zeros((LANE, LANE), np.float32)
    w_hh_p[:Hp, :Hp] = np.asarray(w_hh)
    b_h_p = np.zeros((1, LANE), np.float32)
    b_h_p[0, :Hp] = np.asarray(b_h)

    # merged predictor heads: columns [0:Km)=mortality, [Km:Km+Kl)=los
    w_hd = np.zeros((LANE, LANE), np.float32)
    w_hd[:Hp, :Km] = np.asarray(wm)
    w_hd[:Hp, Km:Km + Kl] = np.asarray(wl)
    b_hd = np.zeros((1, LANE), np.float32)
    b_hd[0, :Km] = np.asarray(bm)
    b_hd[0, Km:Km + Kl] = np.asarray(bl)

    # padded-lane invariant: padding must be exactly zero (tanh(0)=0 keeps it inert)
    assert not w_hh_p[Hp:, :].any() and not w_hh_p[:, Hp:].any()
    assert not b_h_p[0, Hp:].any() and not w_ih_ts[:, Hp:].any()
    assert not w_ih_dem[:, Hp:].any()

    packed = {
        "w_enc0": w_enc[0], "w_enc1": w_enc[1], "w_enc2": w_enc[2],
        "b_ts": jnp.asarray(b_ts),
        "w_ih_dem": jnp.asarray(w_ih_dem, jnp.bfloat16),
        "w_ih_ts": jnp.asarray(w_ih_ts, jnp.bfloat16),
        "w_hh": jnp.asarray(w_hh_p, jnp.bfloat16),
        "b_h": jnp.asarray(b_h_p),
        "w_hd": jnp.asarray(w_hd, jnp.bfloat16),
        "b_hd": jnp.asarray(b_hd),
    }
    meta = dict(H=H, Hp=Hp, Km=Km, Kl=Kl)
    return packed, meta


def _full_spec(shape):
    nd = len(shape)
    return pl.BlockSpec(tuple(shape), lambda i, _nd=nd: (0,) * _nd)


# ---------------------------------------------------------------------------
# Forward pass wrapper: raw inputs + prepacked weights straight into the kernel
# ---------------------------------------------------------------------------
@functools.partial(jax.jit, static_argnames=("H", "Hp", "Km", "Kl"))
def multitask_finetune_forward(packed, dem, chartevents, labevents, outputevents,
                               *, H, Hp, Km, Kl):
    N, L = chartevents.shape[:2]
    c1, c2, c3 = (chartevents.shape[-1], labevents.shape[-1], outputevents.shape[-1])

    # Copy-free row-major flattens only; no concat / pad / transpose / convert.
    x1 = chartevents.reshape(N * L, c1)
    x2 = labevents.reshape(N * L, c2)
    x3 = outputevents.reshape(N * L, c3)

    # batch-major -> time-major permutation matrix (trace-time constant, baked
    # into the executable; zero per-call cost).
    r = np.arange(L * N)
    perm_np = np.zeros((L * N, L * N), np.float32)
    perm_np[r, (r % N) * L + (r // N)] = 1.0
    perm = jnp.asarray(perm_np, jnp.bfloat16)

    inputs = (dem, x1, x2, x3, perm,
              packed["w_enc0"], packed["w_enc1"], packed["w_enc2"],
              packed["b_ts"], packed["w_ih_dem"], packed["w_ih_ts"],
              packed["w_hh"], packed["b_h"], packed["w_hd"], packed["b_hd"])

    out_shapes = (
        jax.ShapeDtypeStruct((N * L, LANE), jnp.bfloat16),   # timestep slab (observable)
        jax.ShapeDtypeStruct((L, N, LANE), jnp.float32),     # patient hidden states
        jax.ShapeDtypeStruct((N, LANE), jnp.float32),        # merged head logits
    )

    flops = 2 * N * L * (c1 + c2 + c3) * LANE        # table encoders
    flops += 2 * (L * N) * (L * N) * LANE            # permutation reorder
    flops += 2 * N * L * LANE * LANE                 # ts -> pre_x
    flops += 2 * N * dem.shape[-1] * LANE            # dem -> pre_c
    flops += 2 * L * N * LANE * LANE                 # RNN h @ W_hh
    flops += 2 * N * LANE * LANE                     # merged heads
    bytes_accessed = sum(int(a.size) * int(a.dtype.itemsize) for a in inputs)
    bytes_accessed += sum(int(np.prod(s.shape)) * int(np.dtype(s.dtype).itemsize)
                          for s in out_shapes)

    ts_out, patient_lnh, heads = pl.pallas_call(
        _fused_kernel,
        out_shape=out_shapes,
        grid=(1,),
        in_specs=[_full_spec(a.shape) for a in inputs],
        out_specs=tuple(_full_spec(s.shape) for s in out_shapes),
        compiler_params=pltpu.CompilerParams(
            dimension_semantics=("arbitrary",)),
        cost_estimate=pl.CostEstimate(
            flops=int(flops),
            transcendentals=int(L * N * LANE),
            bytes_accessed=int(bytes_accessed)),
    )(*inputs)

    # Unpack lane-padded outputs (tiny XLA slices / one transpose on detached
    # observables; all compute already happened in the kernel).
    ts_nlh = ts_out.reshape(N, L, LANE)                       # free reshape
    timesteps = [ts_nlh[:, :, i * H:(i + 1) * H] for i in range(3)]
    patient = jnp.transpose(patient_lnh, (1, 0, 2))[:, :, :Hp]

    preds = {"mortality": heads[:, :Km], "los": heads[:, Km:Km + Kl]}
    outputs = {
        "patient": lax.stop_gradient(patient),
        "timesteps": [lax.stop_gradient(t) for t in timesteps],
    }
    return preds, outputs


# ---------------------------------------------------------------------------
# Pure-JAX reference (same synthetic semantics, mirroring the kernel's
# bf16-operand / f32-accumulate matmul numerics).
# ---------------------------------------------------------------------------
def reference_forward(params, dem, tables):
    def mm(a, w):
        return jnp.dot(a.astype(jnp.bfloat16), w.astype(jnp.bfloat16),
                       preferred_element_type=jnp.float32)

    N, L = tables[0].shape[:2]
    timesteps = []
    for x, (w, b) in zip(tables, params["timestep"]):
        y = mm(x.reshape(N * L, -1), w).reshape(N, L, -1) + b
        timesteps.append(jax.nn.relu(y))
    dem_b = jnp.broadcast_to(dem[:, None, :], (N, L, dem.shape[-1]))
    xcat = jnp.concatenate([dem_b] + timesteps, axis=-1)
    w_ih, w_hh, b_h = params["patient"]

    def step(h, x_t):
        h_new = jnp.tanh(mm(x_t, w_ih) + mm(h, w_hh) + b_h)
        return h_new, h_new

    h0 = jnp.zeros((N, w_hh.shape[0]), jnp.float32)
    _, hs = jax.lax.scan(step, h0, jnp.transpose(xcat, (1, 0, 2)))
    patient = jnp.transpose(hs, (1, 0, 2))
    h_last = patient[:, -1, :]
    wm, bm, wl, bl = params["predictor"]
    preds = {"mortality": mm(h_last, wm) + bm, "los": mm(h_last, wl) + bl}
    return preds, patient, timesteps


def init_params(key, table_dims, dem_dim, H, Hp, los_bins):
    ks = jax.random.split(key, 16)
    params = {"timestep": []}
    for i, c in enumerate(table_dims):
        w = 0.1 * jax.random.normal(ks[i], (c, H), jnp.float32)
        b = 0.05 * jax.random.normal(ks[i + 4], (H,), jnp.float32)
        params["timestep"].append((w, b))
    D = dem_dim + H * len(table_dims)
    params["patient"] = (
        0.1 * jax.random.normal(ks[8], (D, Hp), jnp.float32),
        0.1 * jax.random.normal(ks[9], (Hp, Hp), jnp.float32),
        0.05 * jax.random.normal(ks[10], (Hp,), jnp.float32),
    )
    params["predictor"] = (
        0.1 * jax.random.normal(ks[11], (Hp, 1), jnp.float32),
        jnp.zeros((1,), jnp.float32),
        0.1 * jax.random.normal(ks[12], (Hp, los_bins), jnp.float32),
        jnp.zeros((los_bins,), jnp.float32),
    )
    return params


if __name__ == "__main__":
    N, L = 8, 8                    # batch, sequence length
    table_dims = (16, 12, 20)      # chartevents / labevents / outputevents dims
    dem_dim = 8
    H, Hp, los_bins = 32, 32, 10

    key = jax.random.PRNGKey(0)
    k_dem, k1, k2, k3, k_p = jax.random.split(key, 5)
    dem = jax.random.normal(k_dem, (N, dem_dim), jnp.float32)
    tables = (
        jax.random.normal(k1, (N, L, table_dims[0]), jnp.float32),
        jax.random.normal(k2, (N, L, table_dims[1]), jnp.float32),
        jax.random.normal(k3, (N, L, table_dims[2]), jnp.float32),
    )
    params = init_params(k_p, table_dims, dem_dim, H, Hp, los_bins)

    # one-time weight prepack (no per-call packing inside the jitted forward)
    packed, meta = prepack_params(params, dem_dim)

    preds, outputs = multitask_finetune_forward(packed, dem, *tables, **meta)
    jax.block_until_ready(preds)
    jax.block_until_ready(outputs)

    # correctness check vs pure-JAX reference
    ref_preds, ref_patient, ref_ts = reference_forward(params, dem, tables)
    np.testing.assert_allclose(
        np.asarray(preds["mortality"]), np.asarray(ref_preds["mortality"]),
        rtol=1e-2, atol=1e-2)
    np.testing.assert_allclose(
        np.asarray(preds["los"]), np.asarray(ref_preds["los"]),
        rtol=1e-2, atol=1e-2)
    np.testing.assert_allclose(
        np.asarray(outputs["patient"]), np.asarray(ref_patient),
        rtol=1e-2, atol=1e-2)
    for i in range(3):
        np.testing.assert_allclose(
            np.asarray(outputs["timesteps"][i], dtype=np.float32),
            np.asarray(ref_ts[i]), rtol=2e-2, atol=2e-2)

    print("KERNEL_OK")
</pallas_src>

<mosaic_0001>
module attributes {stable_mosaic.version = 11 : i64} {
  func.func @_fused_kernel(%arg0: i32, %arg1: memref<8x8xf32, #tpu.memory_space<vmem>>, %arg2: memref<64x16xf32, #tpu.memory_space<vmem>>, %arg3: memref<64x12xf32, #tpu.memory_space<vmem>>, %arg4: memref<64x20xf32, #tpu.memory_space<vmem>>, %arg5: memref<64x64xbf16, #tpu.memory_space<vmem>>, %arg6: memref<16x128xbf16, #tpu.memory_space<vmem>>, %arg7: memref<12x128xbf16, #tpu.memory_space<vmem>>, %arg8: memref<20x128xbf16, #tpu.memory_space<vmem>>, %arg9: memref<1x128xf32, #tpu.memory_space<vmem>>, %arg10: memref<8x128xbf16, #tpu.memory_space<vmem>>, %arg11: memref<128x128xbf16, #tpu.memory_space<vmem>>, %arg12: memref<128x128xbf16, #tpu.memory_space<vmem>>, %arg13: memref<1x128xf32, #tpu.memory_space<vmem>>, %arg14: memref<128x128xbf16, #tpu.memory_space<vmem>>, %arg15: memref<1x128xf32, #tpu.memory_space<vmem>>, %arg16: memref<64x128xbf16, #tpu.memory_space<vmem>>, %arg17: memref<8x8x128xf32, #tpu.memory_space<vmem>>, %arg18: memref<8x128xf32, #tpu.memory_space<vmem>>) attributes {dimension_semantics = [#tpu.dimension_semantics<arbitrary>], iteration_bounds = array<i64: 1>, scalar_prefetch = 0 : i64, scratch_operands = 0 : i64, tpu.core_type = #tpu.core_type<tc>, window_params = [{pipeline_mode = #tpu.pipeline_mode<synchronous>, transform_indices = @transform_0, window_bounds = array<i64: 8, 8>}, {pipeline_mode = #tpu.pipeline_mode<synchronous>, transform_indices = @transform_1, window_bounds = array<i64: 64, 16>}, {pipeline_mode = #tpu.pipeline_mode<synchronous>, transform_indices = @transform_2, window_bounds = array<i64: 64, 12>}, {pipeline_mode = #tpu.pipeline_mode<synchronous>, transform_indices = @transform_3, window_bounds = array<i64: 64, 20>}, {pipeline_mode = #tpu.pipeline_mode<synchronous>, transform_indices = @transform_4, window_bounds = array<i64: 64, 64>}, {pipeline_mode = #tpu.pipeline_mode<synchronous>, transform_indices = @transform_5, window_bounds = array<i64: 16, 128>}, {pipeline_mode = #tpu.pipeline_mode<synchronous>, transform_indices = @transform_6, window_bounds = array<i64: 12, 128>}, {pipeline_mode = #tpu.pipeline_mode<synchronous>, transform_indices = @transform_7, window_bounds = array<i64: 20, 128>}, {pipeline_mode = #tpu.pipeline_mode<synchronous>, transform_indices = @transform_8, window_bounds = array<i64: 1, 128>}, {pipeline_mode = #tpu.pipeline_mode<synchronous>, transform_indices = @transform_9, window_bounds = array<i64: 8, 128>}, {pipeline_mode = #tpu.pipeline_mode<synchronous>, transform_indices = @transform_10, window_bounds = array<i64: 128, 128>}, {pipeline_mode = #tpu.pipeline_mode<synchronous>, transform_indices = @transform_11, window_bounds = array<i64: 128, 128>}, {pipeline_mode = #tpu.pipeline_mode<synchronous>, transform_indices = @transform_12, window_bounds = array<i64: 1, 128>}, {pipeline_mode = #tpu.pipeline_mode<synchronous>, transform_indices = @transform_13, window_bounds = array<i64: 128, 128>}, {pipeline_mode = #tpu.pipeline_mode<synchronous>, transform_indices = @transform_14, window_bounds = array<i64: 1, 128>}, {pipeline_mode = #tpu.pipeline_mode<synchronous>, transform_indices = @transform_15, window_bounds = array<i64: 64, 128>}, {pipeline_mode = #tpu.pipeline_mode<synchronous>, transform_indices = @transform_16, window_bounds = array<i64: 8, 8, 128>}, {pipeline_mode = #tpu.pipeline_mode<synchronous>, transform_indices = @transform_17, window_bounds = array<i64: 8, 128>}]} {
    %c0 = arith.constant 0 : index
    %c0_0 = arith.constant 0 : index
    %0 = vector.load %arg2[%c0, %c0_0] : memref<64x16xf32, #tpu.memory_space<vmem>>, vector<64x16xf32>
    %1 = arith.truncf %0 : vector<64x16xf32> to vector<64x16xbf16>
    %c0_1 = arith.constant 0 : index
    %c0_2 = arith.constant 0 : index
    %2 = vector.load %arg6[%c0_1, %c0_2] : memref<16x128xbf16, #tpu.memory_space<vmem>>, vector<16x128xbf16>
    %cst = arith.constant dense<0.000000e+00> : vector<64x128xf32>
    %3 = tpu.matmul %1, %2, %cst {dimension_numbers = #tpu.dot_dimension_numbers<[1], [0], [0], [1], [0, 0, 1, 1], [], []>} : vector<64x16xbf16>, vector<16x128xbf16>, vector<64x128xf32> -> vector<64x128xf32>
    %c0_3 = arith.constant 0 : index
    %c0_4 = arith.constant 0 : index
    %4 = vector.load %arg3[%c0_3, %c0_4] : memref<64x12xf32, #tpu.memory_space<vmem>>, vector<64x12xf32>
    %5 = arith.truncf %4 : vector<64x12xf32> to vector<64x12xbf16>
    %c0_5 = arith.constant 0 : index
    %c0_6 = arith.constant 0 : index
    %6 = vector.load %arg7[%c0_5, %c0_6] : memref<12x128xbf16, #tpu.memory_space<vmem>>, vector<12x128xbf16>
    %cst_7 = arith.constant dense<0.000000e+00> : vector<64x128xf32>
    %7 = tpu.matmul %5, %6, %cst_7 {dimension_numbers = #tpu.dot_dimension_numbers<[1], [0], [0], [1], [0, 0, 1, 1], [], []>} : vector<64x12xbf16>, vector<12x128xbf16>, vector<64x128xf32> -> vector<64x128xf32>
    %8 = arith.addf %3, %7 : vector<64x128xf32>
    %c0_8 = arith.constant 0 : index
    %c0_9 = arith.constant 0 : index
    %9 = vector.load %arg4[%c0_8, %c0_9] : memref<64x20xf32, #tpu.memory_space<vmem>>, vector<64x20xf32>
    %10 = arith.truncf %9 : vector<64x20xf32> to vector<64x20xbf16>
    %c0_10 = arith.constant 0 : index
    %c0_11 = arith.constant 0 : index
    %11 = vector.load %arg8[%c0_10, %c0_11] : memref<20x128xbf16, #tpu.memory_space<vmem>>, vector<20x128xbf16>
    %cst_12 = arith.constant dense<0.000000e+00> : vector<64x128xf32>
    %12 = tpu.matmul %10, %11, %cst_12 {dimension_numbers = #tpu.dot_dimension_numbers<[1], [0], [0], [1], [0, 0, 1, 1], [], []>} : vector<64x20xbf16>, vector<20x128xbf16>, vector<64x128xf32> -> vector<64x128xf32>
    %13 = arith.addf %8, %12 : vector<64x128xf32>
    %c0_13 = arith.constant 0 : index
    %c0_14 = arith.constant 0 : index
    %14 = vector.load %arg9[%c0_13, %c0_14] : memref<1x128xf32, #tpu.memory_space<vmem>>, vector<1x128xf32>
    %15 = vector.broadcast %14 : vector<1x128xf32> to vector<64x128xf32>
    %16 = arith.addf %13, %15 : vector<64x128xf32>
    %cst_15 = arith.constant 0.000000e+00 : f32
    %17 = vector.broadcast %cst_15 : f32 to vector<64x128xf32>
    %18 = arith.maximumf %16, %17 : vector<64x128xf32>
    %19 = arith.truncf %18 : vector<64x128xf32> to vector<64x128xbf16>
    %c0_16 = arith.constant 0 : index
    %c0_17 = arith.constant 0 : index
    %20 = vector.load %arg16[%c0_16, %c0_17] : memref<64x128xbf16, #tpu.memory_space<vmem>>, vector<64x128xbf16>
    tpu.vector_store %arg16[%c0_16, %c0_17], %19 {strides = array<i32>} : memref<64x128xbf16, #tpu.memory_space<vmem>>, vector<64x128xbf16>,
    %c0_18 = arith.constant 0 : index
    %c0_19 = arith.constant 0 : index
    %21 = vector.load %arg5[%c0_18, %c0_19] : memref<64x64xbf16, #tpu.memory_space<vmem>>, vector<64x64xbf16>
    %cst_20 = arith.constant dense<0.000000e+00> : vector<64x128xf32>
    %22 = tpu.matmul %21, %19, %cst_20 {dimension_numbers = #tpu.dot_dimension_numbers<[1], [0], [0], [1], [0, 0, 1, 1], [], []>} : vector<64x64xbf16>, vector<64x128xbf16>, vector<64x128xf32> -> vector<64x128xf32>
    %23 = arith.truncf %22 : vector<64x128xf32> to vector<64x128xbf16>
    %c0_21 = arith.constant 0 : index
    %c0_22 = arith.constant 0 : index
    %24 = vector.load %arg11[%c0_21, %c0_22] : memref<128x128xbf16, #tpu.memory_space<vmem>>, vector<128x128xbf16>
    %cst_23 = arith.constant dense<0.000000e+00> : vector<64x128xf32>
    %25 = tpu.matmul %23, %24, %cst_23 {dimension_numbers = #tpu.dot_dimension_numbers<[1], [0], [0], [1], [0, 0, 1, 1], [], []>} : vector<64x128xbf16>, vector<128x128xbf16>, vector<64x128xf32> -> vector<64x128xf32>
    %c0_24 = arith.constant 0 : index
    %c0_25 = arith.constant 0 : index
    %26 = vector.load %arg1[%c0_24, %c0_25] : memref<8x8xf32, #tpu.memory_space<vmem>>, vector<8x8xf32>
    %27 = arith.truncf %26 : vector<8x8xf32> to vector<8x8xbf16>
    %c0_26 = arith.constant 0 : index
    %c0_27 = arith.constant 0 : index
    %28 = vector.load %arg10[%c0_26, %c0_27] : memref<8x128xbf16, #tpu.memory_space<vmem>>, vector<8x128xbf16>
    %cst_28 = arith.constant dense<0.000000e+00> : vector<8x128xf32>
    %29 = tpu.matmul %27, %28, %cst_28 {dimension_numbers = #tpu.dot_dimension_numbers<[1], [0], [0], [1], [0, 0, 1, 1], [], []>} : vector<8x8xbf16>, vector<8x128xbf16>, vector<8x128xf32> -> vector<8x128xf32>
    %c0_29 = arith.constant 0 : index
    %c0_30 = arith.constant 0 : index
    %30 = vector.load %arg13[%c0_29, %c0_30] : memref<1x128xf32, #tpu.memory_space<vmem>>, vector<1x128xf32>
    %31 = vector.broadcast %30 : vector<1x128xf32> to vector<8x128xf32>
    %32 = arith.addf %29, %31 : vector<8x128xf32>
    %c0_31 = arith.constant 0 : index
    %c0_32 = arith.constant 0 : index
    %33 = vector.load %arg12[%c0_31, %c0_32] : memref<128x128xbf16, #tpu.memory_space<vmem>>, vector<128x128xbf16>
    %cst_33 = arith.constant 0.000000e+00 : f32
    %34 = vector.broadcast %cst_33 : f32 to vector<8x128xf32>
    %35 = vector.extract_strided_slice %25 {offsets = [0, 0], sizes = [8, 128], strides = [1, 1]} : vector<64x128xf32> to vector<8x128xf32>
    %36 = arith.addf %35, %32 : vector<8x128xf32>
    %37 = arith.truncf %34 : vector<8x128xf32> to vector<8x128xbf16>
    %cst_34 = arith.constant dense<0.000000e+00> : vector<8x128xf32>
    %38 = tpu.matmul %37, %33, %cst_34 {dimension_numbers = #tpu.dot_dimension_numbers<[1], [0], [0], [1], [0, 0, 1, 1], [], []>} : vector<8x128xbf16>, vector<128x128xbf16>, vector<8x128xf32> -> vector<8x128xf32>
    %39 = arith.addf %36, %38 : vector<8x128xf32>
    %40 = math.tanh %39 : vector<8x128xf32>
    %c0_35 = arith.constant 0 : index
    %c0_36 = arith.constant 0 : index
    %c0_37 = arith.constant 0 : index
    %41 = vector.load %arg17[%c0_35, %c0_36, %c0_37] : memref<8x8x128xf32, #tpu.memory_space<vmem>>, vector<1x8x128xf32>
    %42 = vector.shape_cast %41 : vector<1x8x128xf32> to vector<8x128xf32>
    %43 = vector.shape_cast %40 : vector<8x128xf32> to vector<1x8x128xf32>
    tpu.vector_store %arg17[%c0_35, %c0_36, %c0_37], %43 {strides = array<i32>} : memref<8x8x128xf32, #tpu.memory_space<vmem>>, vector<1x8x128xf32>,
    %44 = vector.extract_strided_slice %25 {offsets = [8, 0], sizes = [8, 128], strides = [1, 1]} : vector<64x128xf32> to vector<8x128xf32>
    %45 = arith.addf %44, %32 : vector<8x128xf32>
    %46 = arith.truncf %40 : vector<8x128xf32> to vector<8x128xbf16>
    %cst_38 = arith.constant dense<0.000000e+00> : vector<8x128xf32>
    %47 = tpu.matmul %46, %33, %cst_38 {dimension_numbers = #tpu.dot_dimension_numbers<[1], [0], [0], [1], [0, 0, 1, 1], [], []>} : vector<8x128xbf16>, vector<128x128xbf16>, vector<8x128xf32> -> vector<8x128xf32>
    %48 = arith.addf %45, %47 : vector<8x128xf32>
    %49 = math.tanh %48 : vector<8x128xf32>
    %c1 = arith.constant 1 : index
    %c0_39 = arith.constant 0 : index
    %c0_40 = arith.constant 0 : index
    %50 = vector.load %arg17[%c1, %c0_39, %c0_40] : memref<8x8x128xf32, #tpu.memory_space<vmem>>, vector<1x8x128xf32>
    %51 = vector.shape_cast %50 : vector<1x8x128xf32> to vector<8x128xf32>
    %52 = vector.shape_cast %49 : vector<8x128xf32> to vector<1x8x128xf32>
    tpu.vector_store %arg17[%c1, %c0_39, %c0_40], %52 {strides = array<i32>} : memref<8x8x128xf32, #tpu.memory_space<vmem>>, vector<1x8x128xf32>,
    %53 = vector.extract_strided_slice %25 {offsets = [16, 0], sizes = [8, 128], strides = [1, 1]} : vector<64x128xf32> to vector<8x128xf32>
    %54 = arith.addf %53, %32 : vector<8x128xf32>
    %55 = arith.truncf %49 : vector<8x128xf32> to vector<8x128xbf16>
    %cst_41 = arith.constant dense<0.000000e+00> : vector<8x128xf32>
    %56 = tpu.matmul %55, %33, %cst_41 {dimension_numbers = #tpu.dot_dimension_numbers<[1], [0], [0], [1], [0, 0, 1, 1], [], []>} : vector<8x128xbf16>, vector<128x128xbf16>, vector<8x128xf32> -> vector<8x128xf32>
    %57 = arith.addf %54, %56 : vector<8x128xf32>
    %58 = math.tanh %57 : vector<8x128xf32>
    %c2 = arith.constant 2 : index
    %c0_42 = arith.constant 0 : index
    %c0_43 = arith.constant 0 : index
    %59 = vector.load %arg17[%c2, %c0_42, %c0_43] : memref<8x8x128xf32, #tpu.memory_space<vmem>>, vector<1x8x128xf32>
    %60 = vector.shape_cast %59 : vector<1x8x128xf32> to vector<8x128xf32>
    %61 = vector.shape_cast %58 : vector<8x128xf32> to vector<1x8x128xf32>
    tpu.vector_store %arg17[%c2, %c0_42, %c0_43], %61 {strides = array<i32>} : memref<8x8x128xf32, #tpu.memory_space<vmem>>, vector<1x8x128xf32>,
    %62 = vector.extract_strided_slice %25 {offsets = [24, 0], sizes = [8, 128], strides = [1, 1]} : vector<64x128xf32> to vector<8x128xf32>
    %63 = arith.addf %62, %32 : vector<8x128xf32>
    %64 = arith.truncf %58 : vector<8x128xf32> to vector<8x128xbf16>
    %cst_44 = arith.constant dense<0.000000e+00> : vector<8x128xf32>
    %65 = tpu.matmul %64, %33, %cst_44 {dimension_numbers = #tpu.dot_dimension_numbers<[1], [0], [0], [1], [0, 0, 1, 1], [], []>} : vector<8x128xbf16>, vector<128x128xbf16>, vector<8x128xf32> -> vector<8x128xf32>
    %66 = arith.addf %63, %65 : vector<8x128xf32>
    %67 = math.tanh %66 : vector<8x128xf32>
    %c3 = arith.constant 3 : index
    %c0_45 = arith.constant 0 : index
    %c0_46 = arith.constant 0 : index
    %68 = vector.load %arg17[%c3, %c0_45, %c0_46] : memref<8x8x128xf32, #tpu.memory_space<vmem>>, vector<1x8x128xf32>
    %69 = vector.shape_cast %68 : vector<1x8x128xf32> to vector<8x128xf32>
    %70 = vector.shape_cast %67 : vector<8x128xf32> to vector<1x8x128xf32>
    tpu.vector_store %arg17[%c3, %c0_45, %c0_46], %70 {strides = array<i32>} : memref<8x8x128xf32, #tpu.memory_space<vmem>>, vector<1x8x128xf32>,
    %71 = vector.extract_strided_slice %25 {offsets = [32, 0], sizes = [8, 128], strides = [1, 1]} : vector<64x128xf32> to vector<8x128xf32>
    %72 = arith.addf %71, %32 : vector<8x128xf32>
    %73 = arith.truncf %67 : vector<8x128xf32> to vector<8x128xbf16>
    %cst_47 = arith.constant dense<0.000000e+00> : vector<8x128xf32>
    %74 = tpu.matmul %73, %33, %cst_47 {dimension_numbers = #tpu.dot_dimension_numbers<[1], [0], [0], [1], [0, 0, 1, 1], [], []>} : vector<8x128xbf16>, vector<128x128xbf16>, vector<8x128xf32> -> vector<8x128xf32>
    %75 = arith.addf %72, %74 : vector<8x128xf32>
    %76 = math.tanh %75 : vector<8x128xf32>
    %c4 = arith.constant 4 : index
    %c0_48 = arith.constant 0 : index
    %c0_49 = arith.constant 0 : index
    %77 = vector.load %arg17[%c4, %c0_48, %c0_49] : memref<8x8x128xf32, #tpu.memory_space<vmem>>, vector<1x8x128xf32>
    %78 = vector.shape_cast %77 : vector<1x8x128xf32> to vector<8x128xf32>
    %79 = vector.shape_cast %76 : vector<8x128xf32> to vector<1x8x128xf32>
    tpu.vector_store %arg17[%c4, %c0_48, %c0_49], %79 {strides = array<i32>} : memref<8x8x128xf32, #tpu.memory_space<vmem>>, vector<1x8x128xf32>,
    %80 = vector.extract_strided_slice %25 {offsets = [40, 0], sizes = [8, 128], strides = [1, 1]} : vector<64x128xf32> to vector<8x128xf32>
    %81 = arith.addf %80, %32 : vector<8x128xf32>
    %82 = arith.truncf %76 : vector<8x128xf32> to vector<8x128xbf16>
    %cst_50 = arith.constant dense<0.000000e+00> : vector<8x128xf32>
    %83 = tpu.matmul %82, %33, %cst_50 {dimension_numbers = #tpu.dot_dimension_numbers<[1], [0], [0], [1], [0, 0, 1, 1], [], []>} : vector<8x128xbf16>, vector<128x128xbf16>, vector<8x128xf32> -> vector<8x128xf32>
    %84 = arith.addf %81, %83 : vector<8x128xf32>
    %85 = math.tanh %84 : vector<8x128xf32>
    %c5 = arith.constant 5 : index
    %c0_51 = arith.constant 0 : index
    %c0_52 = arith.constant 0 : index
    %86 = vector.load %arg17[%c5, %c0_51, %c0_52] : memref<8x8x128xf32, #tpu.memory_space<vmem>>, vector<1x8x128xf32>
    %87 = vector.shape_cast %86 : vector<1x8x128xf32> to vector<8x128xf32>
    %88 = vector.shape_cast %85 : vector<8x128xf32> to vector<1x8x128xf32>
    tpu.vector_store %arg17[%c5, %c0_51, %c0_52], %88 {strides = array<i32>} : memref<8x8x128xf32, #tpu.memory_space<vmem>>, vector<1x8x128xf32>,
    %89 = vector.extract_strided_slice %25 {offsets = [48, 0], sizes = [8, 128], strides = [1, 1]} : vector<64x128xf32> to vector<8x128xf32>
    %90 = arith.addf %89, %32 : vector<8x128xf32>
    %91 = arith.truncf %85 : vector<8x128xf32> to vector<8x128xbf16>
    %cst_53 = arith.constant dense<0.000000e+00> : vector<8x128xf32>
    %92 = tpu.matmul %91, %33, %cst_53 {dimension_numbers = #tpu.dot_dimension_numbers<[1], [0], [0], [1], [0, 0, 1, 1], [], []>} : vector<8x128xbf16>, vector<128x128xbf16>, vector<8x128xf32> -> vector<8x128xf32>
    %93 = arith.addf %90, %92 : vector<8x128xf32>
    %94 = math.tanh %93 : vector<8x128xf32>
    %c6 = arith.constant 6 : index
    %c0_54 = arith.constant 0 : index
    %c0_55 = arith.constant 0 : index
    %95 = vector.load %arg17[%c6, %c0_54, %c0_55] : memref<8x8x128xf32, #tpu.memory_space<vmem>>, vector<1x8x128xf32>
    %96 = vector.shape_cast %95 : vector<1x8x128xf32> to vector<8x128xf32>
    %97 = vector.shape_cast %94 : vector<8x128xf32> to vector<1x8x128xf32>
    tpu.vector_store %arg17[%c6, %c0_54, %c0_55], %97 {strides = array<i32>} : memref<8x8x128xf32, #tpu.memory_space<vmem>>, vector<1x8x128xf32>,
    %98 = vector.extract_strided_slice %25 {offsets = [56, 0], sizes = [8, 128], strides = [1, 1]} : vector<64x128xf32> to vector<8x128xf32>
    %99 = arith.addf %98, %32 : vector<8x128xf32>
    %100 = arith.truncf %94 : vector<8x128xf32> to vector<8x128xbf16>
    %cst_56 = arith.constant dense<0.000000e+00> : vector<8x128xf32>
    %101 = tpu.matmul %100, %33, %cst_56 {dimension_numbers = #tpu.dot_dimension_numbers<[1], [0], [0], [1], [0, 0, 1, 1], [], []>} : vector<8x128xbf16>, vector<128x128xbf16>, vector<8x128xf32> -> vector<8x128xf32>
    %102 = arith.addf %99, %101 : vector<8x128xf32>
    %103 = math.tanh %102 : vector<8x128xf32>
    %c7 = arith.constant 7 : index
    %c0_57 = arith.constant 0 : index
    %c0_58 = arith.constant 0 : index
    %104 = vector.load %arg17[%c7, %c0_57, %c0_58] : memref<8x8x128xf32, #tpu.memory_space<vmem>>, vector<1x8x128xf32>
    %105 = vector.shape_cast %104 : vector<1x8x128xf32> to vector<8x128xf32>
    %106 = vector.shape_cast %103 : vector<8x128xf32> to vector<1x8x128xf32>
    tpu.vector_store %arg17[%c7, %c0_57, %c0_58], %106 {strides = array<i32>} : memref<8x8x128xf32, #tpu.memory_space<vmem>>, vector<1x8x128xf32>,
    %107 = arith.truncf %103 : vector<8x128xf32> to vector<8x128xbf16>
    %c0_59 = arith.constant 0 : index
    %c0_60 = arith.constant 0 : index
    %108 = vector.load %arg14[%c0_59, %c0_60] : memref<128x128xbf16, #tpu.memory_space<vmem>>, vector<128x128xbf16>
    %cst_61 = arith.constant dense<0.000000e+00> : vector<8x128xf32>
    %109 = tpu.matmul %107, %108, %cst_61 {dimension_numbers = #tpu.dot_dimension_numbers<[1], [0], [0], [1], [0, 0, 1, 1], [], []>} : vector<8x128xbf16>, vector<128x128xbf16>, vector<8x128xf32> -> vector<8x128xf32>
    %c0_62 = arith.constant 0 : index
    %c0_63 = arith.constant 0 : index
    %110 = vector.load %arg15[%c0_62, %c0_63] : memref<1x128xf32, #tpu.memory_space<vmem>>, vector<1x128xf32>
    %111 = vector.broadcast %110 : vector<1x128xf32> to vector<8x128xf32>
    %112 = arith.addf %109, %111 : vector<8x128xf32>
    %c0_64 = arith.constant 0 : index
    %c0_65 = arith.constant 0 : index
    %113 = vector.load %arg18[%c0_64, %c0_65] : memref<8x128xf32, #tpu.memory_space<vmem>>, vector<8x128xf32>
    tpu.vector_store %arg18[%c0_64, %c0_65], %112 {strides = array<i32>} : memref<8x128xf32, #tpu.memory_space<vmem>>, vector<8x128xf32>,
    return
  }
  func.func @transform_0(%arg0: i32) -> (i32, i32) {
    %c0_i32 = arith.constant 0 : i32
    %c0_i32_0 = arith.constant 0 : i32
    %c0_i32_1 = arith.constant 0 : i32
    return %c0_i32, %c0_i32_0 : i32, i32
  }
  func.func @transform_1(%arg0: i32) -> (i32, i32) {
    %c0_i32 = arith.constant 0 : i32
    %c0_i32_0 = arith.constant 0 : i32
    %c0_i32_1 = arith.constant 0 : i32
    return %c0_i32, %c0_i32_0 : i32, i32
  }
  func.func @transform_2(%arg0: i32) -> (i32, i32) {
    %c0_i32 = arith.constant 0 : i32
    %c0_i32_0 = arith.constant 0 : i32
    %c0_i32_1 = arith.constant 0 : i32
    return %c0_i32, %c0_i32_0 : i32, i32
  }
  func.func @transform_3(%arg0: i32) -> (i32, i32) {
    %c0_i32 = arith.constant 0 : i32
    %c0_i32_0 = arith.constant 0 : i32
    %c0_i32_1 = arith.constant 0 : i32
    return %c0_i32, %c0_i32_0 : i32, i32
  }
  func.func @transform_4(%arg0: i32) -> (i32, i32) {
    %c0_i32 = arith.constant 0 : i32
    %c0_i32_0 = arith.constant 0 : i32
    %c0_i32_1 = arith.constant 0 : i32
    return %c0_i32, %c0_i32_0 : i32, i32
  }
  func.func @transform_5(%arg0: i32) -> (i32, i32) {
    %c0_i32 = arith.constant 0 : i32
    %c0_i32_0 = arith.constant 0 : i32
    %c0_i32_1 = arith.constant 0 : i32
    return %c0_i32, %c0_i32_0 : i32, i32
  }
  func.func @transform_6(%arg0: i32) -> (i32, i32) {
    %c0_i32 = arith.constant 0 : i32
    %c0_i32_0 = arith.constant 0 : i32
    %c0_i32_1 = arith.constant 0 : i32
    return %c0_i32, %c0_i32_0 : i32, i32
  }
  func.func @transform_7(%arg0: i32) -> (i32, i32) {
    %c0_i32 = arith.constant 0 : i32
    %c0_i32_0 = arith.constant 0 : i32
    %c0_i32_1 = arith.constant 0 : i32
    return %c0_i32, %c0_i32_0 : i32, i32
  }
  func.func @transform_8(%arg0: i32) -> (i32, i32) {
    %c0_i32 = arith.constant 0 : i32
    %c0_i32_0 = arith.constant 0 : i32
    %c0_i32_1 = arith.constant 0 : i32
    return %c0_i32, %c0_i32_0 : i32, i32
  }
  func.func @transform_9(%arg0: i32) -> (i32, i32) {
    %c0_i32 = arith.constant 0 : i32
    %c0_i32_0 = arith.constant 0 : i32
    %c0_i32_1 = arith.constant 0 : i32
    return %c0_i32, %c0_i32_0 : i32, i32
  }
  func.func @transform_10(%arg0: i32) -> (i32, i32) {
    %c0_i32 = arith.constant 0 : i32
    %c0_i32_0 = arith.constant 0 : i32
    %c0_i32_1 = arith.constant 0 : i32
    return %c0_i32, %c0_i32_0 : i32, i32
  }
  func.func @transform_11(%arg0: i32) -> (i32, i32) {
    %c0_i32 = arith.constant 0 : i32
    %c0_i32_0 = arith.constant 0 : i32
    %c0_i32_1 = arith.constant 0 : i32
    return %c0_i32, %c0_i32_0 : i32, i32
  }
  func.func @transform_12(%arg0: i32) -> (i32, i32) {
    %c0_i32 = arith.constant 0 : i32
    %c0_i32_0 = arith.constant 0 : i32
    %c0_i32_1 = arith.constant 0 : i32
    return %c0_i32, %c0_i32_0 : i32, i32
  }
  func.func @transform_13(%arg0: i32) -> (i32, i32) {
    %c0_i32 = arith.constant 0 : i32
    %c0_i32_0 = arith.constant 0 : i32
    %c0_i32_1 = arith.constant 0 : i32
    return %c0_i32, %c0_i32_0 : i32, i32
  }
  func.func @transform_14(%arg0: i32) -> (i32, i32) {
    %c0_i32 = arith.constant 0 : i32
    %c0_i32_0 = arith.constant 0 : i32
    %c0_i32_1 = arith.constant 0 : i32
    return %c0_i32, %c0_i32_0 : i32, i32
  }
  func.func @transform_15(%arg0: i32) -> (i32, i32) {
    %c0_i32 = arith.constant 0 : i32
    %c0_i32_0 = arith.constant 0 : i32
    %c0_i32_1 = arith.constant 0 : i32
    return %c0_i32, %c0_i32_0 : i32, i32
  }
  func.func @transform_16(%arg0: i32) -> (i32, i32, i32) {
    %c0_i32 = arith.constant 0 : i32
    %c0_i32_0 = arith.constant 0 : i32
    %c0_i32_1 = arith.constant 0 : i32
    %c0_i32_2 = arith.constant 0 : i32
    return %c0_i32, %c0_i32_0, %c0_i32_1 : i32, i32, i32
  }
  func.func @transform_17(%arg0: i32) -> (i32, i32) {
    %c0_i32 = arith.constant 0 : i32
    %c0_i32_0 = arith.constant 0 : i32
    %c0_i32_1 = arith.constant 0 : i32
    return %c0_i32, %c0_i32_0 : i32, i32
  }
}

</mosaic_0001>

<llo_original>
// kernel: multitask_finetune_forward.1
$region0: #{multitask_finetune_forward.1}
  #allocation0 [shape = 'u32[]', space=smem, size = 0x4, offset = 0x4, fixed_abs, tag = 'smem constant byte address 0x4 - core index']
  #allocation1 [shape = 'u32[144,128]{1,0:T(1,128)}', space=vmem, size = 0x12000, scoped, tag = 'internal scratch']
  %s0 = inlined_call_operand.hbm [shape: f32[8,8], index: 0, kind: input, shape index: {}]
  %s1 = inlined_call_operand.hbm [shape: f32[64,16], index: 1, kind: input, shape index: {}]
  %s2 = inlined_call_operand.hbm [shape: f32[64,12], index: 2, kind: input, shape index: {}]
  %s3 = inlined_call_operand.vmem [shape: f32[64,20], index: 3, kind: input, shape index: {}]
  %s4 = inlined_call_operand.hbm [shape: bf16[64,64], index: 4, kind: input, shape index: {}]
  %s5 = inlined_call_operand.hbm [shape: bf16[16,128], index: 5, kind: input, shape index: {}]
  %s6 = inlined_call_operand.hbm [shape: bf16[12,128], index: 6, kind: input, shape index: {}]
  %s7 = inlined_call_operand.hbm [shape: bf16[20,128], index: 7, kind: input, shape index: {}]
  %s8 = inlined_call_operand.hbm [shape: f32[1,128], index: 8, kind: input, shape index: {}]
  %s9 = inlined_call_operand.hbm [shape: bf16[8,128], index: 9, kind: input, shape index: {}]
  %s10 = inlined_call_operand.hbm [shape: bf16[128,128], index: 10, kind: input, shape index: {}]
  %s11 = inlined_call_operand.hbm [shape: bf16[128,128], index: 11, kind: input, shape index: {}]
  %s12 = inlined_call_operand.hbm [shape: f32[1,128], index: 12, kind: input, shape index: {}]
  %s13 = inlined_call_operand.hbm [shape: bf16[128,128], index: 13, kind: input, shape index: {}]
  %s14 = inlined_call_operand.hbm [shape: f32[1,128], index: 14, kind: input, shape index: {}]
  %s15 = inlined_call_operand.vmem [shape: bf16[64,128], index: 15, kind: output, shape index: {0}]
  %s16 = inlined_call_operand.vmem [shape: f32[8,8,128], index: 16, kind: output, shape index: {1}]
  %s17 = inlined_call_operand.vmem [shape: f32[8,128], index: 17, kind: output, shape index: {2}]
  %18 = xla_tuple %s15, %s16, %s17
  %s19 = sld [smem:[#allocation0]]
  $region142: #{multitask_finetune_forward.1} parent=0
    _
  %s21 = ssub.s32 1, %s19
  %s22 = scalar_select 0, %s21, %s19
  $region1: #{multitask_finetune_forward.1} parent=0
    #allocation2 [shape = 'u8[4096]{0}', space=vmem, size = 0x1000, scoped, tag = 'input window, operand 0, single buffered']
    #allocation3 [shape = 's32[1]{0}', space=sflag, size = 0x4, scoped, tag = 'scoped memory for multitask_finetune_forward.1']
    #allocation4 [shape = 'u8[32768]{0}', space=vmem, size = 0x8000, scoped, tag = 'input window, operand 1, single buffered']
    #allocation5 [shape = 's32[1]{0}', space=sflag, size = 0x4, scoped, tag = 'scoped memory for multitask_finetune_forward.1']
    #allocation6 [shape = 'u8[32768]{0}', space=vmem, size = 0x8000, scoped, tag = 'input window, operand 2, single buffered']
    #allocation7 [shape = 'u8[16384]{0}', space=vmem, size = 0x4000, scoped, tag = 'input window, operand 4, single buffered']
    #allocation8 [shape = 's32[1]{0}', space=sflag, size = 0x4, scoped, tag = 'scoped memory for multitask_finetune_forward.1']
    #allocation9 [shape = 'u8[4096]{0}', space=vmem, size = 0x1000, scoped, tag = 'input window, operand 5, single buffered']
    #allocation10 [shape = 'u8[4096]{0}', space=vmem, size = 0x1000, scoped, tag = 'input window, operand 6, single buffered']
    #allocation11 [shape = 's32[1]{0}', space=sflag, size = 0x4, scoped, tag = 'scoped memory for multitask_finetune_forward.1']
    #allocation12 [shape = 'u8[6144]{0}', space=vmem, size = 0x1800, scoped, tag = 'input window, operand 7, single buffered']
    #allocation13 [shape = 'u8[512]{0}', space=vmem, size = 0x400, scoped, tag = 'input window, operand 8, single buffered']
    #allocation14 [shape = 's32[1]{0}', space=sflag, size = 0x4, scoped, tag = 'scoped memory for multitask_finetune_forward.1']
    #allocation15 [shape = 'u8[2048]{0}', space=vmem, size = 0x800, scoped, tag = 'input window, operand 9, single buffered']
    #allocation16 [shape = 'u8[32768]{0}', space=vmem, size = 0x8000, scoped, tag = 'input window, operand 10, single buffered']
    #allocation17 [shape = 's32[1]{0}', space=sflag, size = 0x4, scoped, tag = 'scoped memory for multitask_finetune_forward.1']
    #allocation18 [shape = 'u8[32768]{0}', space=vmem, size = 0x8000, scoped, tag = 'input window, operand 11, single buffered']
    #allocation19 [shape = 'u8[512]{0}', space=vmem, size = 0x400, scoped, tag = 'input window, operand 12, single buffered']
    #allocation20 [shape = 's32[1]{0}', space=sflag, size = 0x4, scoped, tag = 'scoped memory for multitask_finetune_forward.1']
    #allocation21 [shape = 'u8[32768]{0}', space=vmem, size = 0x8000, scoped, tag = 'input window, operand 13, single buffered']
    #allocation22 [shape = 'u8[512]{0}', space=vmem, size = 0x400, scoped, tag = 'input window, operand 14, single buffered']
    #allocation23 [shape = 's32[1]{0}', space=sflag, size = 0x4, scoped, tag = 'scoped memory for multitask_finetune_forward.1']
    %23 = vsyncpa [#allocation3], 0
    %24 = vsyncpa [#allocation5], 0
    %25 = vsyncpa [#allocation8], 0
    %26 = vsyncpa [#allocation11], 0
    %27 = vsyncpa [#allocation14], 0
    %28 = vsyncpa [#allocation17], 0
    %29 = vsyncpa [#allocation20], 0
    %30 = vsyncpa [#allocation23], 0
    // Predicated region
    $region2: #{multitask_finetune_forward.1} parent=1 // pred_check
      _
    $region3: #{multitask_finetune_forward.1} parent=1 // pred_check_branch
      %32 = sbr.rel (0) target = $region5
    $region4: #{multitask_finetune_forward.1} parent=1 // pred_region
      %s34 = ssub.s32 128, 128
      %35 = vsyncadd [#allocation3], %s34
      %s37 = sshll.u32 [#allocation2], 4
      %s38 = int_to_ptr.vmem [resolvable:$true] %s37
      %40 = dma.hbm_to_vmem [thread:$0]  %s0, 128, %s38, [#allocation3]
    $region5: #{multitask_finetune_forward.1} parent=1 // pred_fallthru
      _
    // Predicated region
    $region6: #{multitask_finetune_forward.1} parent=1 // pred_check
      _
    $region7: #{multitask_finetune_forward.1} parent=1 // pred_check_branch
      %42 = sbr.rel (0) target = $region9
    $region8: #{multitask_finetune_forward.1} parent=1 // pred_region
      %s44 = ssub.s32 1024, 1024
      %45 = vsyncadd [#allocation5], %s44
      %s46 = sshll.u32 [#allocation4], 4
      %s47 = int_to_ptr.vmem [resolvable:$true] %s46
      %52 = dma.hbm_to_vmem [thread:$0]  %s1, 1024, %s47, [#allocation5], 128, 128, 8
    $region9: #{multitask_finetune_forward.1} parent=1 // pred_fallthru
      _
    // Predicated region
    $region10: #{multitask_finetune_forward.1} parent=1 // pred_check
      _
    $region11: #{multitask_finetune_forward.1} parent=1 // pred_check_branch
      %54 = sbr.rel (0) target = $region13
    $region12: #{multitask_finetune_forward.1} parent=1 // pred_region
      %s56 = ssub.s32 1024, 1024
      %57 = vsyncadd [#allocation5], %s56
      %s58 = sshll.u32 [#allocation6], 4
      %s59 = int_to_ptr.vmem [resolvable:$true] %s58
      %64 = dma.hbm_to_vmem [thread:$0]  %s2, 1024, %s59, [#allocation5], 128, 128, 8
    $region13: #{multitask_finetune_forward.1} parent=1 // pred_fallthru
      _
    // Predicated region
    $region14: #{multitask_finetune_forward.1} parent=1 // pred_check
      _
    $region15: #{multitask_finetune_forward.1} parent=1 // pred_check_branch
      %66 = sbr.rel (0) target = $region17
    $region16: #{multitask_finetune_forward.1} parent=1 // pred_region
      _
    $region17: #{multitask_finetune_forward.1} parent=1 // pred_fallthru
      _
    // Predicated region
    $region18: #{multitask_finetune_forward.1} parent=1 // pred_check
      _
    $region19: #{multitask_finetune_forward.1} parent=1 // pred_check_branch
      %68 = sbr.rel (0) target = $region21
    $region20: #{multitask_finetune_forward.1} parent=1 // pred_region
      %s70 = ssub.s32 512, 512
      %71 = vsyncadd [#allocation8], %s70
      %s72 = sshll.u32 [#allocation7], 4
      %s73 = int_to_ptr.vmem [resolvable:$true] %s72
      %78 = dma.hbm_to_vmem [thread:$0]  %s4, 512, %s73, [#allocation8], 64, 64, 4
    $region21: #{multitask_finetune_forward.1} parent=1 // pred_fallthru
      _
    // Predicated region
    $region22: #{multitask_finetune_forward.1} parent=1 // pred_check
      _
    $region23: #{multitask_finetune_forward.1} parent=1 // pred_check_branch
      %80 = sbr.rel (0) target = $region25
    $region24: #{multitask_finetune_forward.1} parent=1 // pred_region
      %s82 = ssub.s32 128, 128
      %83 = vsyncadd [#allocation8], %s82
      %s84 = sshll.u32 [#allocation9], 4
      %s85 = int_to_ptr.vmem [resolvable:$true] %s84
      %90 = dma.hbm_to_vmem [thread:$0]  %s5, 128, %s85, [#allocation8], 64, 64, 4
    $region25: #{multitask_finetune_forward.1} parent=1 // pred_fallthru
      _
    // Predicated region
    $region26: #{multitask_finetune_forward.1} parent=1 // pred_check
      _
    $region27: #{multitask_finetune_forward.1} parent=1 // pred_check_branch
      %92 = sbr.rel (0) target = $region29
    $region28: #{multitask_finetune_forward.1} parent=1 // pred_region
      %s94 = ssub.s32 128, 128
      %95 = vsyncadd [#allocation11], %s94
      %s96 = sshll.u32 [#allocation10], 4
      %s97 = int_to_ptr.vmem [resolvable:$true] %s96
      %102 = dma.hbm_to_vmem [thread:$0]  %s6, 128, %s97, [#allocation11], 64, 64, 4
    $region29: #{multitask_finetune_forward.1} parent=1 // pred_fallthru
      _
    // Predicated region
    $region30: #{multitask_finetune_forward.1} parent=1 // pred_check
      _
    $region31: #{multitask_finetune_forward.1} parent=1 // pred_check_branch
      %104 = sbr.rel (0) target = $region33
    $region32: #{multitask_finetune_forward.1} parent=1 // pred_region
      %s106 = ssub.s32 192, 192
      %107 = vsyncadd [#allocation11], %s106
      %s108 = sshll.u32 [#allocation12], 4
      %s109 = int_to_ptr.vmem [resolvable:$true] %s108
      %114 = dma.hbm_to_vmem [thread:$0]  %s7, 192, %s109, [#allocation11], 64, 64, 4
    $region33: #{multitask_finetune_forward.1} parent=1 // pred_fallthru
      _
    // Predicated region
    $region34: #{multitask_finetune_forward.1} parent=1 // pred_check
      _
    $region35: #{multitask_finetune_forward.1} parent=1 // pred_check_branch
      %116 = sbr.rel (0) target = $region37
    $region36: #{multitask_finetune_forward.1} parent=1 // pred_region
      %s118 = ssub.s32 16, 16
      %119 = vsyncadd [#allocation14], %s118
      %s121 = sshll.u32 [#allocation13], 4
      %s122 = int_to_ptr.vmem [resolvable:$true] %s121
      %124 = dma.hbm_to_vmem [thread:$0]  %s8, 16, %s122, [#allocation14]
    $region37: #{multitask_finetune_forward.1} parent=1 // pred_fallthru
      _
    // Predicated region
    $region38: #{multitask_finetune_forward.1} parent=1 // pred_check
      _
    $region39: #{multitask_finetune_forward.1} parent=1 // pred_check_branch
      %126 = sbr.rel (0) target = $region41
    $region40: #{multitask_finetune_forward.1} parent=1 // pred_region
      %s128 = ssub.s32 64, 64
      %129 = vsyncadd [#allocation14], %s128
      %s131 = sshll.u32 [#allocation15], 4
      %s132 = int_to_ptr.vmem [resolvable:$true] %s131
      %134 = dma.hbm_to_vmem [thread:$0]  %s9, 64, %s132, [#allocation14]
    $region41: #{multitask_finetune_forward.1} parent=1 // pred_fallthru
      _
    // Predicated region
    $region42: #{multitask_finetune_forward.1} parent=1 // pred_check
      _
    $region43: #{multitask_finetune_forward.1} parent=1 // pred_check_branch
      %136 = sbr.rel (0) target = $region45
    $region44: #{multitask_finetune_forward.1} parent=1 // pred_region
      %s138 = ssub.s32 1024, 1024
      %139 = vsyncadd [#allocation17], %s138
      %s140 = sshll.u32 [#allocation16], 4
      %s141 = int_to_ptr.vmem [resolvable:$true] %s140
      %146 = dma.hbm_to_vmem [thread:$0]  %s10, 1024, %s141, [#allocation17], 64, 64, 4
    $region45: #{multitask_finetune_forward.1} parent=1 // pred_fallthru
      _
    // Predicated region
    $region46: #{multitask_finetune_forward.1} parent=1 // pred_check
      _
    $region47: #{multitask_finetune_forward.1} parent=1 // pred_check_branch
      %148 = sbr.rel (0) target = $region49
    $region48: #{multitask_finetune_forward.1} parent=1 // pred_region
      %s150 = ssub.s32 1024, 1024
      %151 = vsyncadd [#allocation17], %s150
      %s152 = sshll.u32 [#allocation18], 4
      %s153 = int_to_ptr.vmem [resolvable:$true] %s152
      %158 = dma.hbm_to_vmem [thread:$0]  %s11, 1024, %s153, [#allocation17], 64, 64, 4
    $region49: #{multitask_finetune_forward.1} parent=1 // pred_fallthru
      _
    // Predicated region
    $region50: #{multitask_finetune_forward.1} parent=1 // pred_check
      _
    $region51: #{multitask_finetune_forward.1} parent=1 // pred_check_branch
      %160 = sbr.rel (0) target = $region53
    $region52: #{multitask_finetune_forward.1} parent=1 // pred_region
      %s162 = ssub.s32 16, 16
      %163 = vsyncadd [#allocation20], %s162
      %s165 = sshll.u32 [#allocation19], 4
      %s166 = int_to_ptr.vmem [resolvable:$true] %s165
      %168 = dma.hbm_to_vmem [thread:$0]  %s12, 16, %s166, [#allocation20]
    $region53: #{multitask_finetune_forward.1} parent=1 // pred_fallthru
      _
    // Predicated region
    $region54: #{multitask_finetune_forward.1} parent=1 // pred_check
      _
    $region55: #{multitask_finetune_forward.1} parent=1 // pred_check_branch
      %170 = sbr.rel (0) target = $region57
    $region56: #{multitask_finetune_forward.1} parent=1 // pred_region
      %s172 = ssub.s32 1024, 1024
      %173 = vsyncadd [#allocation20], %s172
      %s174 = sshll.u32 [#allocation21], 4
      %s175 = int_to_ptr.vmem [resolvable:$true] %s174
      %180 = dma.hbm_to_vmem [thread:$0]  %s13, 1024, %s175, [#allocation20], 64, 64, 4
    $region57: #{multitask_finetune_forward.1} parent=1 // pred_fallthru
      _
    // Predicated region
    $region58: #{multitask_finetune_forward.1} parent=1 // pred_check
      _
    $region59: #{multitask_finetune_forward.1} parent=1 // pred_check_branch
      %182 = sbr.rel (0) target = $region61
    $region60: #{multitask_finetune_forward.1} parent=1 // pred_region
      %s184 = ssub.s32 16, 16
      %185 = vsyncadd [#allocation23], %s184
      %s187 = sshll.u32 [#allocation22], 4
      %s188 = int_to_ptr.vmem [resolvable:$true] %s187
      %190 = dma.hbm_to_vmem [thread:$0]  %s14, 16, %s188, [#allocation23]
    $region61: #{multitask_finetune_forward.1} parent=1 // pred_fallthru
      _
    // Predicated region
    $region62: #{multitask_finetune_forward.1} parent=1 // pred_check
      _
    $region63: #{multitask_finetune_forward.1} parent=1 // pred_check_branch
      %192 = sbr.rel (0) target = $region65
    $region64: #{multitask_finetune_forward.1} parent=1 // pred_region
      %193 = dma.done [#allocation3], 128
    $region65: #{multitask_finetune_forward.1} parent=1 // pred_fallthru
      _
    // Predicated region
    $region66: #{multitask_finetune_forward.1} parent=1 // pred_check
      _
    $region67: #{multitask_finetune_forward.1} parent=1 // pred_check_branch
      %195 = sbr.rel (0) target = $region69
    $region68: #{multitask_finetune_forward.1} parent=1 // pred_region
      %196 = dma.done [#allocation5], 1024
    $region69: #{multitask_finetune_forward.1} parent=1 // pred_fallthru
      _
    // Predicated region
    $region70: #{multitask_finetune_forward.1} parent=1 // pred_check
      _
    $region71: #{multitask_finetune_forward.1} parent=1 // pred_check_branch
      %198 = sbr.rel (0) target = $region73
    $region72: #{multitask_finetune_forward.1} parent=1 // pred_region
      %199 = dma.done [#allocation5], 1024
    $region73: #{multitask_finetune_forward.1} parent=1 // pred_fallthru
      _
    // Predicated region
    $region74: #{multitask_finetune_forward.1} parent=1 // pred_check
      _
    $region75: #{multitask_finetune_forward.1} parent=1 // pred_check_branch
      %201 = sbr.rel (0) target = $region77
    $region76: #{multitask_finetune_forward.1} parent=1 // pred_region
      %202 = dma.done [#allocation8], 512
    $region77: #{multitask_finetune_forward.1} parent=1 // pred_fallthru
      _
    // Predicated region
    $region78: #{multitask_finetune_forward.1} parent=1 // pred_check
      _
    $region79: #{multitask_finetune_forward.1} parent=1 // pred_check_branch
      %204 = sbr.rel (0) target = $region81
    $region80: #{multitask_finetune_forward.1} parent=1 // pred_region
      %205 = dma.done [#allocation8], 128
    $region81: #{multitask_finetune_forward.1} parent=1 // pred_fallthru
      _
    // Predicated region
    $region82: #{multitask_finetune_forward.1} parent=1 // pred_check
      _
    $region83: #{multitask_finetune_forward.1} parent=1 // pred_check_branch
      %207 = sbr.rel (0) target = $region85
    $region84: #{multitask_finetune_forward.1} parent=1 // pred_region
      %208 = dma.done [#allocation11], 128
    $region85: #{multitask_finetune_forward.1} parent=1 // pred_fallthru
      _
    // Predicated region
    $region86: #{multitask_finetune_forward.1} parent=1 // pred_check
      _
    $region87: #{multitask_finetune_forward.1} parent=1 // pred_check_branch
      %210 = sbr.rel (0) target = $region89
    $region88: #{multitask_finetune_forward.1} parent=1 // pred_region
      %211 = dma.done [#allocation11], 192
    $region89: #{multitask_finetune_forward.1} parent=1 // pred_fallthru
      _
    // Predicated region
    $region90: #{multitask_finetune_forward.1} parent=1 // pred_check
      _
    $region91: #{multitask_finetune_forward.1} parent=1 // pred_check_branch
      %213 = sbr.rel (0) target = $region93
    $region92: #{multitask_finetune_forward.1} parent=1 // pred_region
      %214 = dma.done [#allocation14], 16
    $region93: #{multitask_finetune_forward.1} parent=1 // pred_fallthru
      _
    // Predicated region
    $region94: #{multitask_finetune_forward.1} parent=1 // pred_check
      _
    $region95: #{multitask_finetune_forward.1} parent=1 // pred_check_branch
      %216 = sbr.rel (0) target = $region97
    $region96: #{multitask_finetune_forward.1} parent=1 // pred_region
      %217 = dma.done [#allocation14], 64
    $region97: #{multitask_finetune_forward.1} parent=1 // pred_fallthru
      _
    // Predicated region
    $region98: #{multitask_finetune_forward.1} parent=1 // pred_check
      _
    $region99: #{multitask_finetune_forward.1} parent=1 // pred_check_branch
      %219 = sbr.rel (0) target = $region101
    $region100: #{multitask_finetune_forward.1} parent=1 // pred_region
      %220 = dma.done [#allocation17], 1024
    $region101: #{multitask_finetune_forward.1} parent=1 // pred_fallthru
      _
    // Predicated region
    $region102: #{multitask_finetune_forward.1} parent=1 // pred_check
      _
    $region103: #{multitask_finetune_forward.1} parent=1 // pred_check_branch
      %222 = sbr.rel (0) target = $region105
    $region104: #{multitask_finetune_forward.1} parent=1 // pred_region
      %223 = dma.done [#allocation17], 1024
    $region105: #{multitask_finetune_forward.1} parent=1 // pred_fallthru
      _
    // Predicated region
    $region106: #{multitask_finetune_forward.1} parent=1 // pred_check
      _
    $region107: #{multitask_finetune_forward.1} parent=1 // pred_check_branch
      %225 = sbr.rel (0) target = $region109
    $region108: #{multitask_finetune_forward.1} parent=1 // pred_region
      %226 = dma.done [#allocation20], 16
    $region109: #{multitask_finetune_forward.1} parent=1 // pred_fallthru
      _
    // Predicated region
    $region110: #{multitask_finetune_forward.1} parent=1 // pred_check
      _
    $region111: #{multitask_finetune_forward.1} parent=1 // pred_check_branch
      %228 = sbr.rel (0) target = $region113
    $region112: #{multitask_finetune_forward.1} parent=1 // pred_region
      %229 = dma.done [#allocation20], 1024
    $region113: #{multitask_finetune_forward.1} parent=1 // pred_fallthru
      _
    // Predicated region
    $region114: #{multitask_finetune_forward.1} parent=1 // pred_check
      _
    $region115: #{multitask_finetune_forward.1} parent=1 // pred_check_branch
      %231 = sbr.rel (0) target = $region117
    $region116: #{multitask_finetune_forward.1} parent=1 // pred_region
      %232 = dma.done [#allocation23], 16
    $region117: #{multitask_finetune_forward.1} parent=1 // pred_fallthru
      _
    %v234 = vld [vmem:[#allocation4] sm:$0xff]
    %v235 = vld [vmem:[#allocation4 + $0x8] sm:$0xff]
    %v236 = vld [vmem:[#allocation4 + $0x10] sm:$0xff]
    %v237 = vld [vmem:[#allocation4 + $0x18] sm:$0xff]
    %v238 = vld [vmem:[#allocation4 + $0x20] sm:$0xff]
    %v239 = vld [vmem:[#allocation4 + $0x28] sm:$0xff]
    %v240 = vld [vmem:[#allocation4 + $0x30] sm:$0xff]
    %v241 = vld [vmem:[#allocation4 + $0x38] sm:$0xff]
    %v242 = vpack.c.bf16 %v235, %v234
    %v243 = vpack.c.bf16 %v237, %v236
    %v244 = vpack.c.bf16 %v239, %v238
    %v245 = vpack.c.bf16 %v241, %v240
    %v246 = vld [vmem:[#allocation9] sm:$0xf]
    %v247 = vld [vmem:[#allocation9 + $0x4] sm:$0xf]
    %v248 = vld [vmem:[#allocation6] sm:$0xff]
    %v249 = vld [vmem:[#allocation6 + $0x8] sm:$0xff]
    %v250 = vld [vmem:[#allocation6 + $0x10] sm:$0xff]
    %v251 = vld [vmem:[#allocation6 + $0x18] sm:$0xff]
    %v252 = vld [vmem:[#allocation6 + $0x20] sm:$0xff]
    %v253 = vld [vmem:[#allocation6 + $0x28] sm:$0xff]
    %v254 = vld [vmem:[#allocation6 + $0x30] sm:$0xff]
    %v255 = vld [vmem:[#allocation6 + $0x38] sm:$0xff]
    %v256 = vpack.c.bf16 %v249, %v248
    %v257 = vpack.c.bf16 %v251, %v250
    %v258 = vpack.c.bf16 %v253, %v252
    %v259 = vpack.c.bf16 %v255, %v254
    %v260 = vld [vmem:[#allocation10] sm:$0xf]
    %v261 = vld [vmem:[#allocation10 + $0x4] sm:$0x3]
    %v264 = vunpack.c.l.b16 %v260
    %v265 = vunpack.c.l.b16 %v261
    %v266 = vpack.c.b16 %v265, %v264
    %vm267 = vcmask 97280
    %v269 = vsel %vm267, %v256, 0
    %v272 = vsel %vm267, %v257, 0
    %v275 = vsel %vm267, %v258, 0
    %v278 = vsel %vm267, %v259, 0
    %vm280 = vcmask 1045504
    %v282 = vsel %vm280, %v266, 0
    %284 = vmatprep.subr.bf16.mxu0 0
    %285 = vmatpush1.bf16.msra.mxu0 %v282
    %286 = vmatprep.subr.bf16.mxu0 0
    %287 = vmatpush1.bf16.msra.mxu0 0
    %288 = vmatprep.subr.bf16.mxu0 0
    %289 = vmatpush1.bf16.msra.mxu0 0
    %290 = vmatprep.subr.bf16.mxu0 0
    %291 = vmatpush1.bf16.msra.mxu0 0
    %292 = vmatprep.subr.bf16.mxu0 0
    %293 = vmatpush1.bf16.msra.mxu0 0
    %294 = vmatprep.subr.bf16.mxu0 0
    %295 = vmatpush1.bf16.msra.mxu0 0
    %296 = vmatprep.subr.bf16.mxu0 0
    %297 = vmatpush1.bf16.msra.mxu0 0
    %298 = vmatprep.subr.bf16.mxu0 0
    %299 = vmatpush1.bf16.msra.mxu0 0
    %300 = vmatprep.subr.bf16.mxu0 0
    %301 = vmatpush1.bf16.msra.mxu0 0
    %302 = vmatprep.subr.bf16.mxu0 0
    %303 = vmatpush1.bf16.msra.mxu0 0
    %304 = vmatprep.subr.bf16.mxu0 0
    %305 = vmatpush1.bf16.msra.mxu0 0
    %306 = vmatprep.subr.bf16.mxu0 0
    %307 = vmatpush1.bf16.msra.mxu0 0
    %308 = vmatprep.subr.bf16.mxu0 0
    %309 = vmatpush1.bf16.msra.mxu0 0
    %310 = vmatprep.subr.bf16.mxu0 0
    %311 = vmatpush1.bf16.msra.mxu0 0
    %312 = vmatprep.subr.bf16.mxu0 0
    %313 = vmatpush1.bf16.msra.mxu0 0
    %314 = vmatprep.subr.bf16.mxu0 0
    %315 = vmatpush1.bf16.msra.mxu0 0
    %316 = vmatprep.mubr.bf16.mxu0 0
    %317 = vmatmul.mubr.bf16.gmra.mrb[0].mxu0 %v269
    %v318 = vpop.f32.mrb[0].mxu0
    %v319 = vadd.f32 0.0, %v318
    %v320 = vpop.f32.mrb[0].mxu0
    %v321 = vpop.f32.mrb[0].mxu0
    %v322 = vadd.f32 0.0, %v321
    %v323 = vpop.f32.mrb[0].mxu0
    %324 = vmatprep.mubr.bf16.mxu0 0
    %325 = vmatmul.mubr.bf16.gmra.mrb[0].mxu0 %v272
    %v326 = vpop.f32.mrb[0].mxu0
    %v327 = vadd.f32 0.0, %v326
    %v328 = vpop.f32.mrb[0].mxu0
    %v329 = vpop.f32.mrb[0].mxu0
    %v330 = vadd.f32 0.0, %v329
    %v331 = vpop.f32.mrb[0].mxu0
    %332 = vmatprep.mubr.bf16.mxu0 0
    %333 = vmatmul.mubr.bf16.gmra.mrb[0].mxu0 %v275
    %v334 = vpop.f32.mrb[0].mxu0
    %v335 = vadd.f32 0.0, %v334
    %v336 = vpop.f32.mrb[0].mxu0
    %v337 = vpop.f32.mrb[0].mxu0
    %v338 = vadd.f32 0.0, %v337
    %v339 = vpop.f32.mrb[0].mxu0
    %340 = vmatprep.mubr.bf16.mxu0 0
    %341 = vmatmul.mubr.bf16.gmra.mrb[0].mxu0 %v278
    %v342 = vpop.f32.mrb[0].mxu0
    %v343 = vadd.f32 0.0, %v342
    %v344 = vpop.f32.mrb[0].mxu0
    %v345 = vpop.f32.mrb[0].mxu0
    %v346 = vadd.f32 0.0, %v345
    %v347 = vpop.f32.mrb[0].mxu0
    %348 = vdwg.mxu0
    %v351 = vunpack.c.l.b16 %v246
    %v352 = vunpack.c.l.b16 %v247
    %v353 = vpack.c.b16 %v352, %v351
    %vm355 = vcmask 130048
    %v357 = vsel %vm355, %v242, 0
    %v360 = vsel %vm355, %v243, 0
    %v363 = vsel %vm355, %v244, 0
    %v366 = vsel %vm355, %v245, 0
    %368 = vmatprep.subr.bf16.mxu0 0
    %369 = vmatpush1.bf16.msra.mxu0 %v353
    %370 = vmatprep.subr.bf16.mxu0 0
    %371 = vmatpush1.bf16.msra.mxu0 0
    %372 = vmatprep.subr.bf16.mxu0 0
    %373 = vmatpush1.bf16.msra.mxu0 0
    %374 = vmatprep.subr.bf16.mxu0 0
    %375 = vmatpush1.bf16.msra.mxu0 0
    %376 = vmatprep.subr.bf16.mxu0 0
    %377 = vmatpush1.bf16.msra.mxu0 0
    %378 = vmatprep.subr.bf16.mxu0 0
    %379 = vmatpush1.bf16.msra.mxu0 0
    %380 = vmatprep.subr.bf16.mxu0 0
    %381 = vmatpush1.bf16.msra.mxu0 0
    %382 = vmatprep.subr.bf16.mxu0 0
    %383 = vmatpush1.bf16.msra.mxu0 0
    %384 = vmatprep.subr.bf16.mxu0 0
    %385 = vmatpush1.bf16.msra.mxu0 0
    %386 = vmatprep.subr.bf16.mxu0 0
    %387 = vmatpush1.bf16.msra.mxu0 0
    %388 = vmatprep.subr.bf16.mxu0 0
    %389 = vmatpush1.bf16.msra.mxu0 0
    %390 = vmatprep.subr.bf16.mxu0 0
    %391 = vmatpush1.bf16.msra.mxu0 0
    %392 = vmatprep.subr.bf16.mxu0 0
    %393 = vmatpush1.bf16.msra.mxu0 0
    %394 = vmatprep.subr.bf16.mxu0 0
    %395 = vmatpush1.bf16.msra.mxu0 0
    %396 = vmatprep.subr.bf16.mxu0 0
    %397 = vmatpush1.bf16.msra.mxu0 0
    %398 = vmatprep.subr.bf16.mxu0 0
    %399 = vmatpush1.bf16.msra.mxu0 0
    %400 = vmatprep.mubr.bf16.mxu0 0
    %401 = vmatmul.mubr.bf16.gmra.mrb[0].mxu0 %v357
    %v402 = vpop.f32.mrb[0].mxu0
    %v403 = vadd.f32 %v319, %v402
    %v404 = vpop.f32.mrb[0].mxu0
    %v405 = vpop.f32.mrb[0].mxu0
    %v406 = vadd.f32 %v322, %v405
    %v407 = vpop.f32.mrb[0].mxu0
    %408 = vmatprep.mubr.bf16.mxu0 0
    %409 = vmatmul.mubr.bf16.gmra.mrb[0].mxu0 %v360
    %v410 = vpop.f32.mrb[0].mxu0
    %v411 = vadd.f32 %v327, %v410
    %v412 = vpop.f32.mrb[0].mxu0
    %v413 = vpop.f32.mrb[0].mxu0
    %v414 = vadd.f32 %v330, %v413
    %v415 = vpop.f32.mrb[0].mxu0
    %416 = vmatprep.mubr.bf16.mxu0 0
    %417 = vmatmul.mubr.bf16.gmra.mrb[0].mxu0 %v363
    %v418 = vpop.f32.mrb[0].mxu0
    %v419 = vadd.f32 %v335, %v418
    %v420 = vpop.f32.mrb[0].mxu0
    %v421 = vpop.f32.mrb[0].mxu0
    %v422 = vadd.f32 %v338, %v421
    %v423 = vpop.f32.mrb[0].mxu0
    %424 = vmatprep.mubr.bf16.mxu0 0
    %425 = vmatmul.mubr.bf16.gmra.mrb[0].mxu0 %v366
    %v426 = vpop.f32.mrb[0].mxu0
    %v427 = vadd.f32 %v343, %v426
    %v428 = vpop.f32.mrb[0].mxu0
    %v429 = vpop.f32.mrb[0].mxu0
    %v430 = vadd.f32 %v346, %v429
    %v431 = vpop.f32.mrb[0].mxu0
    %432 = vdwg.mxu0
    %v433 = vld [vmem:[%s3] sm:$0xff]
    %v434 = vld [vmem:[%s3 + $0x8] sm:$0xff]
    %v435 = vld [vmem:[%s3 + $0x10] sm:$0xff]
    %v436 = vld [vmem:[%s3 + $0x18] sm:$0xff]
    %v437 = vld [vmem:[%s3 + $0x20] sm:$0xff]
    %v438 = vld [vmem:[%s3 + $0x28] sm:$0xff]
    %v439 = vld [vmem:[%s3 + $0x30] sm:$0xff]
    %v440 = vld [vmem:[%s3 + $0x38] sm:$0xff]
    %v441 = vpack.c.bf16 %v434, %v433
    %v442 = vpack.c.bf16 %v436, %v435
    %v443 = vpack.c.bf16 %v438, %v437
    %v444 = vpack.c.bf16 %v440, %v439
    %v445 = vld [vmem:[#allocation12] sm:$0xf]
    %v446 = vld [vmem:[#allocation12 + $0x4] sm:$0xf]
    %v447 = vld [vmem:[#allocation12 + $0x8] sm:$0x3]
    %v451 = vunpack.c.l.b16 %v445
    %v452 = vunpack.c.l.b16 %v446
    %v453 = vunpack.c.l.b16 %v447
    %v454 = vpack.c.b16 %v452, %v451
    %v455 = vpack.c.b16 %v453, %v453
    %vm457 = vcmask 162816
    %v459 = vsel %vm457, %v441, 0
    %v462 = vsel %vm457, %v442, 0
    %v465 = vsel %vm457, %v443, 0
    %v468 = vsel %vm457, %v444, 0
    %vm470 = vcmask 1041408
    %v472 = vsel %vm470, %v455, 0
    %474 = vmatprep.subr.bf16.mxu0 0
    %475 = vmatpush1.bf16.msra.mxu0 %v454
    %476 = vmatprep.subr.bf16.mxu0 0
    %477 = vmatpush1.bf16.msra.mxu0 %v472
    %478 = vmatprep.subr.bf16.mxu0 0
    %479 = vmatpush1.bf16.msra.mxu0 0
    %480 = vmatprep.subr.bf16.mxu0 0
    %481 = vmatpush1.bf16.msra.mxu0 0
    %482 = vmatprep.subr.bf16.mxu0 0
    %483 = vmatpush1.bf16.msra.mxu0 0
    %484 = vmatprep.subr.bf16.mxu0 0
    %485 = vmatpush1.bf16.msra.mxu0 0
    %486 = vmatprep.subr.bf16.mxu0 0
    %487 = vmatpush1.bf16.msra.mxu0 0
    %488 = vmatprep.subr.bf16.mxu0 0
    %489 = vmatpush1.bf16.msra.mxu0 0
    %490 = vmatprep.subr.bf16.mxu0 0
    %491 = vmatpush1.bf16.msra.mxu0 0
    %492 = vmatprep.subr.bf16.mxu0 0
    %493 = vmatpush1.bf16.msra.mxu0 0
    %494 = vmatprep.subr.bf16.mxu0 0
    %495 = vmatpush1.bf16.msra.mxu0 0
    %496 = vmatprep.subr.bf16.mxu0 0
    %497 = vmatpush1.bf16.msra.mxu0 0
    %498 = vmatprep.subr.bf16.mxu0 0
    %499 = vmatpush1.bf16.msra.mxu0 0
    %500 = vmatprep.subr.bf16.mxu0 0
    %501 = vmatpush1.bf16.msra.mxu0 0
    %502 = vmatprep.subr.bf16.mxu0 0
    %503 = vmatpush1.bf16.msra.mxu0 0
    %504 = vmatprep.subr.bf16.mxu0 0
    %505 = vmatpush1.bf16.msra.mxu0 0
    %506 = vmatprep.mubr.bf16.mxu0 0
    %507 = vmatmul.mubr.bf16.gmra.mrb[0].mxu0 %v459
    %v508 = vpop.f32.mrb[0].mxu0
    %v509 = vadd.f32 0.0, %v508
    %v510 = vpop.f32.mrb[0].mxu0
    %v511 = vpop.f32.mrb[0].mxu0
    %v512 = vadd.f32 0.0, %v511
    %v513 = vpop.f32.mrb[0].mxu0
    %514 = vmatprep.mubr.bf16.mxu0 0
    %515 = vmatmul.mubr.bf16.gmra.mrb[0].mxu0 %v462
    %v516 = vpop.f32.mrb[0].mxu0
    %v517 = vadd.f32 0.0, %v516
    %v518 = vpop.f32.mrb[0].mxu0
    %v519 = vpop.f32.mrb[0].mxu0
    %v520 = vadd.f32 0.0, %v519
    %v521 = vpop.f32.mrb[0].mxu0
    %522 = vmatprep.mubr.bf16.mxu0 0
    %523 = vmatmul.mubr.bf16.gmra.mrb[0].mxu0 %v465
    %v524 = vpop.f32.mrb[0].mxu0
    %v525 = vadd.f32 0.0, %v524
    %v526 = vpop.f32.mrb[0].mxu0
    %v527 = vpop.f32.mrb[0].mxu0
    %v528 = vadd.f32 0.0, %v527
    %v529 = vpop.f32.mrb[0].mxu0
    %530 = vmatprep.mubr.bf16.mxu0 0
    %531 = vmatmul.mubr.bf16.gmra.mrb[0].mxu0 %v468
    %v532 = vpop.f32.mrb[0].mxu0
    %v533 = vadd.f32 0.0, %v532
    %v534 = vpop.f32.mrb[0].mxu0
    %v535 = vpop.f32.mrb[0].mxu0
    %v536 = vadd.f32 0.0, %v535
    %v537 = vpop.f32.mrb[0].mxu0
    %538 = vdwg.mxu0
    %v539 = vadd.f32 %v403, %v509
    %v540 = vadd.f32 %v406, %v512
    %v541 = vadd.f32 %v411, %v517
    %v542 = vadd.f32 %v414, %v520
    %v543 = vadd.f32 %v419, %v525
    %v544 = vadd.f32 %v422, %v528
    %v545 = vadd.f32 %v427, %v533
    %v546 = vadd.f32 %v430, %v536
    %v547 = vld [vmem:[#allocation13] sm:$0x1]
    %v549 = vlaneseq
    %v550 = vshrl.u32 %v549, 7
    %v551 = vsub.s32 0, %v550
    %v552 = vrot.slane %v547, %v551
    %v554 = vadd.f32 %v539, %v552
    %v555 = vadd.f32 %v540, %v552
    %v556 = vadd.f32 %v541, %v552
    %v557 = vadd.f32 %v542, %v552
    %v558 = vadd.f32 %v543, %v552
    %v559 = vadd.f32 %v544, %v552
    %v560 = vadd.f32 %v545, %v552
    %v561 = vadd.f32 %v546, %v552
    %v562 = vmax.f32 %v554, 0.0
    %v563 = vmax.f32 %v555, 0.0
    %v564 = vmax.f32 %v556, 0.0
    %v565 = vmax.f32 %v557, 0.0
    %v566 = vmax.f32 %v558, 0.0
    %v567 = vmax.f32 %v559, 0.0
    %v568 = vmax.f32 %v560, 0.0
    %v569 = vmax.f32 %v561, 0.0
    %v570 = vpack.c.bf16 %v563, %v562
    %v571 = vpack.c.bf16 %v565, %v564
    %v572 = vpack.c.bf16 %v567, %v566
    %v573 = vpack.c.bf16 %v569, %v568
    %v578 = vunpack.c.l.b16 %v570
    %v579 = vunpack.c.h.b16 %v570
    %v580 = vunpack.c.l.b16 %v571
    %v581 = vunpack.c.h.b16 %v571
    %v582 = vunpack.c.l.b16 %v572
    %v583 = vunpack.c.h.b16 %v572
    %v584 = vunpack.c.l.b16 %v573
    %v585 = vunpack.c.h.b16 %v573
    %v586 = vpack.c.b16 %v578, %v578
    %v587 = vpack.c.b16 %v579, %v579
    %v588 = vpack.c.b16 %v580, %v580
    %v589 = vpack.c.b16 %v581, %v581
    %v590 = vpack.c.b16 %v582, %v582
    %v591 = vpack.c.b16 %v583, %v583
    %v592 = vpack.c.b16 %v584, %v584
    %v593 = vpack.c.b16 %v585, %v585
    %602 = vst [vmem:[%s15] sm:$0xf] %v586
    %603 = vst [vmem:[%s15 + $0x4] sm:$0xf] %v587
    %604 = vst [vmem:[%s15 + $0x8] sm:$0xf] %v588
    %605 = vst [vmem:[%s15 + $0xc] sm:$0xf] %v589
    %606 = vst [vmem:[%s15 + $0x10] sm:$0xf] %v590
    %607 = vst [vmem:[%s15 + $0x14] sm:$0xf] %v591
    %608 = vst [vmem:[%s15 + $0x18] sm:$0xf] %v592
    %609 = vst [vmem:[%s15 + $0x1c] sm:$0xf] %v593
    %v610 = vld [vmem:[#allocation7] sm:$0xf]
    %v611 = vld [vmem:[#allocation7 + $0x4] sm:$0xf]
    %v612 = vld [vmem:[#allocation7 + $0x8] sm:$0xf]
    %v613 = vld [vmem:[#allocation7 + $0xc] sm:$0xf]
    %v614 = vld [vmem:[#allocation7 + $0x10] sm:$0xf]
    %v615 = vld [vmem:[#allocation7 + $0x14] sm:$0xf]
    %v616 = vld [vmem:[#allocation7 + $0x18] sm:$0xf]
    %v617 = vld [vmem:[#allocation7 + $0x1c] sm:$0xf]
    %v626 = vunpack.c.l.b16 %v610
    %v627 = vunpack.c.l.b16 %v611
    %v628 = vunpack.c.l.b16 %v612
    %v629 = vunpack.c.l.b16 %v613
    %v630 = vunpack.c.l.b16 %v614
    %v631 = vunpack.c.l.b16 %v615
    %v632 = vunpack.c.l.b16 %v616
    %v633 = vunpack.c.l.b16 %v617
    %v634 = vpack.c.b16 %v627, %v626
    %v635 = vpack.c.b16 %v629, %v628
    %v636 = vpack.c.b16 %v631, %v630
    %v637 = vpack.c.b16 %v633, %v632
    %vm638 = vcmask 523264
    %v640 = vsel %vm638, %v634, 0
    %v643 = vsel %vm638, %v635, 0
    %v646 = vsel %vm638, %v636, 0
    %v649 = vsel %vm638, %v637, 0
    %651 = vmatprep.subr.bf16.mxu0 0
    %652 = vmatpush1.bf16.msra.mxu0 %v570
    %653 = vmatprep.subr.bf16.mxu0 0
    %654 = vmatpush1.bf16.msra.mxu0 %v571
    %655 = vmatprep.subr.bf16.mxu0 0
    %656 = vmatpush1.bf16.msra.mxu0 %v572
    %657 = vmatprep.subr.bf16.mxu0 0
    %658 = vmatpush1.bf16.msra.mxu0 %v573
    %659 = vmatprep.subr.bf16.mxu0 0
    %660 = vmatpush1.bf16.msra.mxu0 0
    %661 = vmatprep.subr.bf16.mxu0 0
    %662 = vmatpush1.bf16.msra.mxu0 0
    %663 = vmatprep.subr.bf16.mxu0 0
    %664 = vmatpush1.bf16.msra.mxu0 0
    %665 = vmatprep.subr.bf16.mxu0 0
    %666 = vmatpush1.bf16.msra.mxu0 0
    %667 = vmatprep.subr.bf16.mxu0 0
    %668 = vmatpush1.bf16.msra.mxu0 0
    %669 = vmatprep.subr.bf16.mxu0 0
    %670 = vmatpush1.bf16.msra.mxu0 0
    %671 = vmatprep.subr.bf16.mxu0 0
    %672 = vmatpush1.bf16.msra.mxu0 0
    %673 = vmatprep.subr.bf16.mxu0 0
    %674 = vmatpush1.bf16.msra.mxu0 0
    %675 = vmatprep.subr.bf16.mxu0 0
    %676 = vmatpush1.bf16.msra.mxu0 0
    %677 = vmatprep.subr.bf16.mxu0 0
    %678 = vmatpush1.bf16.msra.mxu0 0
    %679 = vmatprep.subr.bf16.mxu0 0
    %680 = vmatpush1.bf16.msra.mxu0 0
    %681 = vmatprep.subr.bf16.mxu0 0
    %682 = vmatpush1.bf16.msra.mxu0 0
    %683 = vmatprep.mubr.bf16.mxu0 0
    %684 = vmatmul.mubr.bf16.gmra.mrb[0].mxu0 %v640
    %v685 = vpop.f32.mrb[0].mxu0
    %v686 = vadd.f32 0.0, %v685
    %v687 = vpop.f32.mrb[0].mxu0
    %v688 = vpop.f32.mrb[0].mxu0
    %v689 = vadd.f32 0.0, %v688
    %v690 = vpop.f32.mrb[0].mxu0
    %691 = vmatprep.mubr.bf16.mxu0 0
    %692 = vmatmul.mubr.bf16.gmra.mrb[0].mxu0 %v643
    %v693 = vpop.f32.mrb[0].mxu0
    %v694 = vadd.f32 0.0, %v693
    %v695 = vpop.f32.mrb[0].mxu0
    %v696 = vpop.f32.mrb[0].mxu0
    %v697 = vadd.f32 0.0, %v696
    %v698 = vpop.f32.mrb[0].mxu0
    %699 = vmatprep.mubr.bf16.mxu0 0
    %700 = vmatmul.mubr.bf16.gmra.mrb[0].mxu0 %v646
    %v701 = vpop.f32.mrb[0].mxu0
    %v702 = vadd.f32 0.0, %v701
    %v703 = vpop.f32.mrb[0].mxu0
    %v704 = vpop.f32.mrb[0].mxu0
    %v705 = vadd.f32 0.0, %v704
    %v706 = vpop.f32.mrb[0].mxu0
    %707 = vmatprep.mubr.bf16.mxu0 0
    %708 = vmatmul.mubr.bf16.gmra.mrb[0].mxu0 %v649
    %v709 = vpop.f32.mrb[0].mxu0
    %v710 = vadd.f32 0.0, %v709
    %v711 = vpop.f32.mrb[0].mxu0
    %v712 = vpop.f32.mrb[0].mxu0
    %v713 = vadd.f32 0.0, %v712
    %v714 = vpop.f32.mrb[0].mxu0
    %715 = vdwg.mxu0
    %v716 = vpack.c.bf16 %v689, %v686
    %v717 = vpack.c.bf16 %v697, %v694
    %v718 = vpack.c.bf16 %v705, %v702
    %v719 = vpack.c.bf16 %v713, %v710
    %v720 = vld [vmem:[#allocation16] sm:$0xf]
    %v721 = vld [vmem:[#allocation16 + $0x4] sm:$0xf]
    %v722 = vld [vmem:[#allocation16 + $0x8] sm:$0xf]
    %v723 = vld [vmem:[#allocation16 + $0xc] sm:$0xf]
    %v724 = vld [vmem:[#allocation16 + $0x10] sm:$0xf]
    %v725 = vld [vmem:[#allocation16 + $0x14] sm:$0xf]
    %v726 = vld [vmem:[#allocation16 + $0x18] sm:$0xf]
    %v727 = vld [vmem:[#allocation16 + $0x1c] sm:$0xf]
    %v728 = vld [vmem:[#allocation16 + $0x20] sm:$0xf]
    %v729 = vld [vmem:[#allocation16 + $0x24] sm:$0xf]
    %v730 = vld [vmem:[#allocation16 + $0x28] sm:$0xf]
    %v731 = vld [vmem:[#allocation16 + $0x2c] sm:$0xf]
    %v732 = vld [vmem:[#allocation16 + $0x30] sm:$0xf]
    %v733 = vld [vmem:[#allocation16 + $0x34] sm:$0xf]
    %v734 = vld [vmem:[#allocation16 + $0x38] sm:$0xf]
    %v735 = vld [vmem:[#allocation16 + $0x3c] sm:$0xf]
    %v752 = vunpack.c.l.b16 %v720
    %v753 = vunpack.c.l.b16 %v721
    %v754 = vunpack.c.l.b16 %v722
    %v755 = vunpack.c.l.b16 %v723
    %v756 = vunpack.c.l.b16 %v724
    %v757 = vunpack.c.l.b16 %v725
    %v758 = vunpack.c.l.b16 %v726
    %v759 = vunpack.c.l.b16 %v727
    %v760 = vunpack.c.l.b16 %v728
    %v761 = vunpack.c.l.b16 %v729
    %v762 = vunpack.c.l.b16 %v730
    %v763 = vunpack.c.l.b16 %v731
    %v764 = vunpack.c.l.b16 %v732
    %v765 = vunpack.c.l.b16 %v733
    %v766 = vunpack.c.l.b16 %v734
    %v767 = vunpack.c.l.b16 %v735
    %v768 = vpack.c.b16 %v753, %v752
    %v769 = vpack.c.b16 %v755, %v754
    %v770 = vpack.c.b16 %v757, %v756
    %v771 = vpack.c.b16 %v759, %v758
    %v772 = vpack.c.b16 %v761, %v760
    %v773 = vpack.c.b16 %v763, %v762
    %v774 = vpack.c.b16 %v765, %v764
    %v775 = vpack.c.b16 %v767, %v766
    %784 = vmatprep.subr.bf16.mxu0 0
    %785 = vmatpush1.bf16.msra.mxu0 %v768
    %786 = vmatprep.subr.bf16.mxu0 0
    %787 = vmatpush1.bf16.msra.mxu0 %v769
    %788 = vmatprep.subr.bf16.mxu0 0
    %789 = vmatpush1.bf16.msra.mxu0 %v770
    %790 = vmatprep.subr.bf16.mxu0 0
    %791 = vmatpush1.bf16.msra.mxu0 %v771
    %792 = vmatprep.subr.bf16.mxu0 0
    %793 = vmatpush1.bf16.msra.mxu0 %v772
    %794 = vmatprep.subr.bf16.mxu0 0
    %795 = vmatpush1.bf16.msra.mxu0 %v773
    %796 = vmatprep.subr.bf16.mxu0 0
    %797 = vmatpush1.bf16.msra.mxu0 %v774
    %798 = vmatprep.subr.bf16.mxu0 0
    %799 = vmatpush1.bf16.msra.mxu0 %v775
    %800 = vmatprep.subr.bf16.mxu0 0
    %801 = vmatpush1.bf16.msra.mxu0 0
    %802 = vmatprep.subr.bf16.mxu0 0
    %803 = vmatpush1.bf16.msra.mxu0 0
    %804 = vmatprep.subr.bf16.mxu0 0
    %805 = vmatpush1.bf16.msra.mxu0 0
    %806 = vmatprep.subr.bf16.mxu0 0
    %807 = vmatpush1.bf16.msra.mxu0 0
    %808 = vmatprep.subr.bf16.mxu0 0
    %809 = vmatpush1.bf16.msra.mxu0 0
    %810 = vmatprep.subr.bf16.mxu0 0
    %811 = vmatpush1.bf16.msra.mxu0 0
    %812 = vmatprep.subr.bf16.mxu0 0
    %813 = vmatpush1.bf16.msra.mxu0 0
    %814 = vmatprep.subr.bf16.mxu0 0
    %815 = vmatpush1.bf16.msra.mxu0 0
    %816 = vmatprep.mubr.bf16.mxu0 0
    %817 = vmatmul.mubr.bf16.gmra.mrb[0].mxu0 %v716
    %v818 = vpop.f32.mrb[0].mxu0
    %v819 = vadd.f32 0.0, %v818
    %v820 = vpop.f32.mrb[0].mxu0
    %v821 = vpop.f32.mrb[0].mxu0
    %v822 = vadd.f32 0.0, %v821
    %v823 = vpop.f32.mrb[0].mxu0
    %824 = vmatprep.mubr.bf16.mxu0 0
    %825 = vmatmul.mubr.bf16.gmra.mrb[0].mxu0 %v717
    %v826 = vpop.f32.mrb[0].mxu0
    %v827 = vadd.f32 0.0, %v826
    %v828 = vpop.f32.mrb[0].mxu0
    %v829 = vpop.f32.mrb[0].mxu0
    %v830 = vadd.f32 0.0, %v829
    %v831 = vpop.f32.mrb[0].mxu0
    %832 = vmatprep.mubr.bf16.mxu0 0
    %833 = vmatmul.mubr.bf16.gmra.mrb[0].mxu0 %v718
    %v834 = vpop.f32.mrb[0].mxu0
    %v835 = vadd.f32 0.0, %v834
    %v836 = vpop.f32.mrb[0].mxu0
    %v837 = vpop.f32.mrb[0].mxu0
    %v838 = vadd.f32 0.0, %v837
    %v839 = vpop.f32.mrb[0].mxu0
    %840 = vmatprep.mubr.bf16.mxu0 0
    %841 = vmatmul.mubr.bf16.gmra.mrb[0].mxu0 %v719
    %v842 = vpop.f32.mrb[0].mxu0
    %v843 = vadd.f32 0.0, %v842
    %v844 = vpop.f32.mrb[0].mxu0
    %v845 = vpop.f32.mrb[0].mxu0
    %v846 = vadd.f32 0.0, %v845
    %v847 = vpop.f32.mrb[0].mxu0
    %848 = vdwg.mxu0
    %v849 = vld [vmem:[#allocation2] sm:$0xff]
    %v850 = vpack.c.bf16 %v849, %v849
    %v851 = vld [vmem:[#allocation15] sm:$0xf]
    %v852 = vld [vmem:[#allocation19] sm:$0x1]
    %v854 = vlaneseq
    %v855 = vshrl.u32 %v854, 7
    %v856 = vsub.s32 0, %v855
    %v857 = vrot.slane %v852, %v856
    %vm859 = vcmask 64512
    %v861 = vsel %vm859, %v850, 0
    %vm863 = vcmask 1043456
    %v865 = vsel %vm863, %v851, 0
    %867 = vmatprep.subr.bf16.mxu0 0
    %868 = vmatpush1.bf16.msra.mxu0 %v865
    %869 = vmatprep.subr.bf16.mxu0 0
    %870 = vmatpush1.bf16.msra.mxu0 0
    %871 = vmatprep.subr.bf16.mxu0 0
    %872 = vmatpush1.bf16.msra.mxu0 0
    %873 = vmatprep.subr.bf16.mxu0 0
    %874 = vmatpush1.bf16.msra.mxu0 0
    %875 = vmatprep.subr.bf16.mxu0 0
    %876 = vmatpush1.bf16.msra.mxu0 0
    %877 = vmatprep.subr.bf16.mxu0 0
    %878 = vmatpush1.bf16.msra.mxu0 0
    %879 = vmatprep.subr.bf16.mxu0 0
    %880 = vmatpush1.bf16.msra.mxu0 0
    %881 = vmatprep.subr.bf16.mxu0 0
    %882 = vmatpush1.bf16.msra.mxu0 0
    %883 = vmatprep.subr.bf16.mxu0 0
    %884 = vmatpush1.bf16.msra.mxu0 0
    %885 = vmatprep.subr.bf16.mxu0 0
    %886 = vmatpush1.bf16.msra.mxu0 0
    %887 = vmatprep.subr.bf16.mxu0 0
    %888 = vmatpush1.bf16.msra.mxu0 0
    %889 = vmatprep.subr.bf16.mxu0 0
    %890 = vmatpush1.bf16.msra.mxu0 0
    %891 = vmatprep.subr.bf16.mxu0 0
    %892 = vmatpush1.bf16.msra.mxu0 0
    %893 = vmatprep.subr.bf16.mxu0 0
    %894 = vmatpush1.bf16.msra.mxu0 0
    %895 = vmatprep.subr.bf16.mxu0 0
    %896 = vmatpush1.bf16.msra.mxu0 0
    %897 = vmatprep.subr.bf16.mxu0 0
    %898 = vmatpush1.bf16.msra.mxu0 0
    %899 = vmatprep.mubr.bf16.mxu0 0
    %900 = vmatmul.mubr.bf16.gmra.mrb[0].mxu0 %v861
    %v901 = vpop.f32.mrb[0].mxu0
    %v902 = vadd.f32 %v857, %v901
    %v903 = vpop.f32.mrb[0].mxu0
    %v904 = vpop.f32.mrb[0].mxu0
    %v905 = vpop.f32.mrb[0].mxu0
    %906 = vdwg.mxu0
    %v907 = vld [vmem:[#allocation18] sm:$0xf]
    %v908 = vld [vmem:[#allocation18 + $0x4] sm:$0xf]
    %v909 = vld [vmem:[#allocation18 + $0x8] sm:$0xf]
    %v910 = vld [vmem:[#allocation18 + $0xc] sm:$0xf]
    %v911 = vld [vmem:[#allocation18 + $0x10] sm:$0xf]
    %v912 = vld [vmem:[#allocation18 + $0x14] sm:$0xf]
    %v913 = vld [vmem:[#allocation18 + $0x18] sm:$0xf]
    %v914 = vld [vmem:[#allocation18 + $0x1c] sm:$0xf]
    %v915 = vld [vmem:[#allocation18 + $0x20] sm:$0xf]
    %v916 = vld [vmem:[#allocation18 + $0x24] sm:$0xf]
    %v917 = vld [vmem:[#allocation18 + $0x28] sm:$0xf]
    %v918 = vld [vmem:[#allocation18 + $0x2c] sm:$0xf]
    %v919 = vld [vmem:[#allocation18 + $0x30] sm:$0xf]
    %v920 = vld [vmem:[#allocation18 + $0x34] sm:$0xf]
    %v921 = vld [vmem:[#allocation18 + $0x38] sm:$0xf]
    %v922 = vld [vmem:[#allocation18 + $0x3c] sm:$0xf]
    %v923 = vadd.f32 %v819, %v902
    %v940 = vunpack.c.l.b16 %v907
    %v941 = vunpack.c.l.b16 %v908
    %v942 = vunpack.c.l.b16 %v909
    %v943 = vunpack.c.l.b16 %v910
    %v944 = vunpack.c.l.b16 %v911
    %v945 = vunpack.c.l.b16 %v912
    %v946 = vunpack.c.l.b16 %v913
    %v947 = vunpack.c.l.b16 %v914
    %v948 = vunpack.c.l.b16 %v915
    %v949 = vunpack.c.l.b16 %v916
    %v950 = vunpack.c.l.b16 %v917
    %v951 = vunpack.c.l.b16 %v918
    %v952 = vunpack.c.l.b16 %v919
    %v953 = vunpack.c.l.b16 %v920
    %v954 = vunpack.c.l.b16 %v921
    %v955 = vunpack.c.l.b16 %v922
    %v956 = vpack.c.b16 %v941, %v940
    %v957 = vpack.c.b16 %v943, %v942
    %v958 = vpack.c.b16 %v945, %v944
    %v959 = vpack.c.b16 %v947, %v946
    %v960 = vpack.c.b16 %v949, %v948
    %v961 = vpack.c.b16 %v951, %v950
    %v962 = vpack.c.b16 %v953, %v952
    %v963 = vpack.c.b16 %v955, %v954
    %972 = vmatprep.subr.bf16.mxu0 0
    %973 = vmatpush1.bf16.msra.mxu0 %v956
    %974 = vmatprep.subr.bf16.mxu0 0
    %975 = vmatpush1.bf16.msra.mxu0 %v957
    %976 = vmatprep.subr.bf16.mxu0 0
    %977 = vmatpush1.bf16.msra.mxu0 %v958
    %978 = vmatprep.subr.bf16.mxu0 0
    %979 = vmatpush1.bf16.msra.mxu0 %v959
    %980 = vmatprep.subr.bf16.mxu0 0
    %981 = vmatpush1.bf16.msra.mxu0 %v960
    %982 = vmatprep.subr.bf16.mxu0 0
    %983 = vmatpush1.bf16.msra.mxu0 %v961
    %984 = vmatprep.subr.bf16.mxu0 0
    %985 = vmatpush1.bf16.msra.mxu0 %v962
    %986 = vmatprep.subr.bf16.mxu0 0
    %987 = vmatpush1.bf16.msra.mxu0 %v963
    %988 = vmatprep.subr.bf16.mxu0 0
    %989 = vmatpush1.bf16.msra.mxu0 0
    %990 = vmatprep.subr.bf16.mxu0 0
    %991 = vmatpush1.bf16.msra.mxu0 0
    %992 = vmatprep.subr.bf16.mxu0 0
    %993 = vmatpush1.bf16.msra.mxu0 0
    %994 = vmatprep.subr.bf16.mxu0 0
    %995 = vmatpush1.bf16.msra.mxu0 0
    %996 = vmatprep.subr.bf16.mxu0 0
    %997 = vmatpush1.bf16.msra.mxu0 0
    %998 = vmatprep.subr.bf16.mxu0 0
    %999 = vmatpush1.bf16.msra.mxu0 0
    %1000 = vmatprep.subr.bf16.mxu0 0
    %1001 = vmatpush1.bf16.msra.mxu0 0
    %1002 = vmatprep.subr.bf16.mxu0 0
    %1003 = vmatpush1.bf16.msra.mxu0 0
    %1004 = vmatprep.mubr.bf16.mxu0 0
    %1005 = vmatmul.mubr.bf16.gmra.mrb[0].mxu0 0
    %v1006 = vpop.f32.mrb[0].mxu0
    %v1007 = vadd.f32 0.0, %v1006
    %v1008 = vpop.f32.mrb[0].mxu0
    %v1009 = vpop.f32.mrb[0].mxu0
    %v1010 = vpop.f32.mrb[0].mxu0
    %1011 = vdwg.mxu0
    %v1012 = vadd.f32 %v923, %v1007
    %v1013 = vtanh.pop %v1012
    %1014 = vst [vmem:[%s16] sm:$0xff] %v1013
    %v1015 = vadd.f32 %v822, %v902
    %v1016 = vpack.c.bf16 %v1013, %v1013
    %1017 = vmatprep.subr.bf16.mxu0 0
    %1018 = vmatpush1.bf16.msra.mxu0 %v956
    %1019 = vmatprep.subr.bf16.mxu0 0
    %1020 = vmatpush1.bf16.msra.mxu0 %v957
    %1021 = vmatprep.subr.bf16.mxu0 0
    %1022 = vmatpush1.bf16.msra.mxu0 %v958
    %1023 = vmatprep.subr.bf16.mxu0 0
    %1024 = vmatpush1.bf16.msra.mxu0 %v959
    %1025 = vmatprep.subr.bf16.mxu0 0
    %1026 = vmatpush1.bf16.msra.mxu0 %v960
    %1027 = vmatprep.subr.bf16.mxu0 0
    %1028 = vmatpush1.bf16.msra.mxu0 %v961
    %1029 = vmatprep.subr.bf16.mxu0 0
    %1030 = vmatpush1.bf16.msra.mxu0 %v962
    %1031 = vmatprep.subr.bf16.mxu0 0
    %1032 = vmatpush1.bf16.msra.mxu0 %v963
    %1033 = vmatprep.subr.bf16.mxu0 0
    %1034 = vmatpush1.bf16.msra.mxu0 0
    %1035 = vmatprep.subr.bf16.mxu0 0
    %1036 = vmatpush1.bf16.msra.mxu0 0
    %1037 = vmatprep.subr.bf16.mxu0 0
    %1038 = vmatpush1.bf16.msra.mxu0 0
    %1039 = vmatprep.subr.bf16.mxu0 0
    %1040 = vmatpush1.bf16.msra.mxu0 0
    %1041 = vmatprep.subr.bf16.mxu0 0
    %1042 = vmatpush1.bf16.msra.mxu0 0
    %1043 = vmatprep.subr.bf16.mxu0 0
    %1044 = vmatpush1.bf16.msra.mxu0 0
    %1045 = vmatprep.subr.bf16.mxu0 0
    %1046 = vmatpush1.bf16.msra.mxu0 0
    %1047 = vmatprep.subr.bf16.mxu0 0
    %1048 = vmatpush1.bf16.msra.mxu0 0
    %1049 = vmatprep.mubr.bf16.mxu0 0
    %1050 = vmatmul.mubr.bf16.gmra.mrb[0].mxu0 %v1016
    %v1051 = vpop.f32.mrb[0].mxu0
    %v1052 = vadd.f32 0.0, %v1051
    %v1053 = vpop.f32.mrb[0].mxu0
    %v1054 = vpop.f32.mrb[0].mxu0
    %v1055 = vpop.f32.mrb[0].mxu0
    %1056 = vdwg.mxu0
    %v1057 = vadd.f32 %v1015, %v1052
    %v1058 = vtanh.pop %v1057
    %s1059 = scalar_lea.vmem %s16, 8
    %1060 = vst [vmem:[%s1059] sm:$0xff] %v1058
    %v1061 = vadd.f32 %v827, %v902
    %v1062 = vpack.c.bf16 %v1058, %v1058
    %1063 = vmatprep.subr.bf16.mxu0 0
    %1064 = vmatpush1.bf16.msra.mxu0 %v956
    %1065 = vmatprep.subr.bf16.mxu0 0
    %1066 = vmatpush1.bf16.msra.mxu0 %v957
    %1067 = vmatprep.subr.bf16.mxu0 0
    %1068 = vmatpush1.bf16.msra.mxu0 %v958
    %1069 = vmatprep.subr.bf16.mxu0 0
    %1070 = vmatpush1.bf16.msra.mxu0 %v959
    %1071 = vmatprep.subr.bf16.mxu0 0
    %1072 = vmatpush1.bf16.msra.mxu0 %v960
    %1073 = vmatprep.subr.bf16.mxu0 0
    %1074 = vmatpush1.bf16.msra.mxu0 %v961
    %1075 = vmatprep.subr.bf16.mxu0 0
    %1076 = vmatpush1.bf16.msra.mxu0 %v962
    %1077 = vmatprep.subr.bf16.mxu0 0
    %1078 = vmatpush1.bf16.msra.mxu0 %v963
    %1079 = vmatprep.subr.bf16.mxu0 0
    %1080 = vmatpush1.bf16.msra.mxu0 0
    %1081 = vmatprep.subr.bf16.mxu0 0
    %1082 = vmatpush1.bf16.msra.mxu0 0
    %1083 = vmatprep.subr.bf16.mxu0 0
    %1084 = vmatpush1.bf16.msra.mxu0 0
    %1085 = vmatprep.subr.bf16.mxu0 0
    %1086 = vmatpush1.bf16.msra.mxu0 0
    %1087 = vmatprep.subr.bf16.mxu0 0
    %1088 = vmatpush1.bf16.msra.mxu0 0
    %1089 = vmatprep.subr.bf16.mxu0 0
    %1090 = vmatpush1.bf16.msra.mxu0 0
    %1091 = vmatprep.subr.bf16.mxu0 0
    %1092 = vmatpush1.bf16.msra.mxu0 0
    %1093 = vmatprep.subr.bf16.mxu0 0
    %1094 = vmatpush1.bf16.msra.mxu0 0
    %1095 = vmatprep.mubr.bf16.mxu0 0
    %1096 = vmatmul.mubr.bf16.gmra.mrb[0].mxu0 %v1062
    %v1097 = vpop.f32.mrb[0].mxu0
    %v1098 = vadd.f32 0.0, %v1097
    %v1099 = vpop.f32.mrb[0].mxu0
    %v1100 = vpop.f32.mrb[0].mxu0
    %v1101 = vpop.f32.mrb[0].mxu0
    %1102 = vdwg.mxu0
    %v1103 = vadd.f32 %v1061, %v1098
    %v1104 = vtanh.pop %v1103
    %s1105 = scalar_lea.vmem %s16, 16
    %1106 = vst [vmem:[%s1105] sm:$0xff] %v1104
    %v1107 = vadd.f32 %v830, %v902
    %v1108 = vpack.c.bf16 %v1104, %v1104
    %1109 = vmatprep.subr.bf16.mxu0 0
    %1110 = vmatpush1.bf16.msra.mxu0 %v956
    %1111 = vmatprep.subr.bf16.mxu0 0
    %1112 = vmatpush1.bf16.msra.mxu0 %v957
    %1113 = vmatprep.subr.bf16.mxu0 0
    %1114 = vmatpush1.bf16.msra.mxu0 %v958
    %1115 = vmatprep.subr.bf16.mxu0 0
    %1116 = vmatpush1.bf16.msra.mxu0 %v959
    %1117 = vmatprep.subr.bf16.mxu0 0
    %1118 = vmatpush1.bf16.msra.mxu0 %v960
    %1119 = vmatprep.subr.bf16.mxu0 0
    %1120 = vmatpush1.bf16.msra.mxu0 %v961
    %1121 = vmatprep.subr.bf16.mxu0 0
    %1122 = vmatpush1.bf16.msra.mxu0 %v962
    %1123 = vmatprep.subr.bf16.mxu0 0
    %1124 = vmatpush1.bf16.msra.mxu0 %v963
    %1125 = vmatprep.subr.bf16.mxu0 0
    %1126 = vmatpush1.bf16.msra.mxu0 0
    %1127 = vmatprep.subr.bf16.mxu0 0
    %1128 = vmatpush1.bf16.msra.mxu0 0
    %1129 = vmatprep.subr.bf16.mxu0 0
    %1130 = vmatpush1.bf16.msra.mxu0 0
    %1131 = vmatprep.subr.bf16.mxu0 0
    %1132 = vmatpush1.bf16.msra.mxu0 0
    %1133 = vmatprep.subr.bf16.mxu0 0
    %1134 = vmatpush1.bf16.msra.mxu0 0
    %1135 = vmatprep.subr.bf16.mxu0 0
    %1136 = vmatpush1.bf16.msra.mxu0 0
    %1137 = vmatprep.subr.bf16.mxu0 0
    %1138 = vmatpush1.bf16.msra.mxu0 0
    %1139 = vmatprep.subr.bf16.mxu0 0
    %1140 = vmatpush1.bf16.msra.mxu0 0
    %1141 = vmatprep.mubr.bf16.mxu0 0
    %1142 = vmatmul.mubr.bf16.gmra.mrb[0].mxu0 %v1108
    %v1143 = vpop.f32.mrb[0].mxu0
    %v1144 = vadd.f32 0.0, %v1143
    %v1145 = vpop.f32.mrb[0].mxu0
    %v1146 = vpop.f32.mrb[0].mxu0
    %v1147 = vpop.f32.mrb[0].mxu0
    %1148 = vdwg.mxu0
    %v1149 = vadd.f32 %v1107, %v1144
    %v1150 = vtanh.pop %v1149
    %s1151 = scalar_lea.vmem %s16, 24
    %1152 = vst [vmem:[%s1151] sm:$0xff] %v1150
    %v1153 = vadd.f32 %v835, %v902
    %v1154 = vpack.c.bf16 %v1150, %v1150
    %1155 = vmatprep.subr.bf16.mxu0 0
    %1156 = vmatpush1.bf16.msra.mxu0 %v956
    %1157 = vmatprep.subr.bf16.mxu0 0
    %1158 = vmatpush1.bf16.msra.mxu0 %v957
    %1159 = vmatprep.subr.bf16.mxu0 0
    %1160 = vmatpush1.bf16.msra.mxu0 %v958
    %1161 = vmatprep.subr.bf16.mxu0 0
    %1162 = vmatpush1.bf16.msra.mxu0 %v959
    %1163 = vmatprep.subr.bf16.mxu0 0
    %1164 = vmatpush1.bf16.msra.mxu0 %v960
    %1165 = vmatprep.subr.bf16.mxu0 0
    %1166 = vmatpush1.bf16.msra.mxu0 %v961
    %1167 = vmatprep.subr.bf16.mxu0 0
    %1168 = vmatpush1.bf16.msra.mxu0 %v962
    %1169 = vmatprep.subr.bf16.mxu0 0
    %1170 = vmatpush1.bf16.msra.mxu0 %v963
    %1171 = vmatprep.subr.bf16.mxu0 0
    %1172 = vmatpush1.bf16.msra.mxu0 0
    %1173 = vmatprep.subr.bf16.mxu0 0
    %1174 = vmatpush1.bf16.msra.mxu0 0
    %1175 = vmatprep.subr.bf16.mxu0 0
    %1176 = vmatpush1.bf16.msra.mxu0 0
    %1177 = vmatprep.subr.bf16.mxu0 0
    %1178 = vmatpush1.bf16.msra.mxu0 0
    %1179 = vmatprep.subr.bf16.mxu0 0
    %1180 = vmatpush1.bf16.msra.mxu0 0
    %1181 = vmatprep.subr.bf16.mxu0 0
    %1182 = vmatpush1.bf16.msra.mxu0 0
    %1183 = vmatprep.subr.bf16.mxu0 0
    %1184 = vmatpush1.bf16.msra.mxu0 0
    %1185 = vmatprep.subr.bf16.mxu0 0
    %1186 = vmatpush1.bf16.msra.mxu0 0
    %1187 = vmatprep.mubr.bf16.mxu0 0
    %1188 = vmatmul.mubr.bf16.gmra.mrb[0].mxu0 %v1154
    %v1189 = vpop.f32.mrb[0].mxu0
    %v1190 = vadd.f32 0.0, %v1189
    %v1191 = vpop.f32.mrb[0].mxu0
    %v1192 = vpop.f32.mrb[0].mxu0
    %v1193 = vpop.f32.mrb[0].mxu0
    %1194 = vdwg.mxu0
    %v1195 = vadd.f32 %v1153, %v1190
    %v1196 = vtanh.pop %v1195
    %s1197 = scalar_lea.vmem %s16, 32
    %1198 = vst [vmem:[%s1197] sm:$0xff] %v1196
    %v1199 = vadd.f32 %v838, %v902
    %v1200 = vpack.c.bf16 %v1196, %v1196
    %1201 = vmatprep.subr.bf16.mxu0 0
    %1202 = vmatpush1.bf16.msra.mxu0 %v956
    %1203 = vmatprep.subr.bf16.mxu0 0
    %1204 = vmatpush1.bf16.msra.mxu0 %v957
    %1205 = vmatprep.subr.bf16.mxu0 0
    %1206 = vmatpush1.bf16.msra.mxu0 %v958
    %1207 = vmatprep.subr.bf16.mxu0 0
    %1208 = vmatpush1.bf16.msra.mxu0 %v959
    %1209 = vmatprep.subr.bf16.mxu0 0
    %1210 = vmatpush1.bf16.msra.mxu0 %v960
    %1211 = vmatprep.subr.bf16.mxu0 0
    %1212 = vmatpush1.bf16.msra.mxu0 %v961
    %1213 = vmatprep.subr.bf16.mxu0 0
    %1214 = vmatpush1.bf16.msra.mxu0 %v962
    %1215 = vmatprep.subr.bf16.mxu0 0
    %1216 = vmatpush1.bf16.msra.mxu0 %v963
    %1217 = vmatprep.subr.bf16.mxu0 0
    %1218 = vmatpush1.bf16.msra.mxu0 0
    %1219 = vmatprep.subr.bf16.mxu0 0
    %1220 = vmatpush1.bf16.msra.mxu0 0
    %1221 = vmatprep.subr.bf16.mxu0 0
    %1222 = vmatpush1.bf16.msra.mxu0 0
    %1223 = vmatprep.subr.bf16.mxu0 0
    %1224 = vmatpush1.bf16.msra.mxu0 0
    %1225 = vmatprep.subr.bf16.mxu0 0
    %1226 = vmatpush1.bf16.msra.mxu0 0
    %1227 = vmatprep.subr.bf16.mxu0 0
    %1228 = vmatpush1.bf16.msra.mxu0 0
    %1229 = vmatprep.subr.bf16.mxu0 0
    %1230 = vmatpush1.bf16.msra.mxu0 0
    %1231 = vmatprep.subr.bf16.mxu0 0
    %1232 = vmatpush1.bf16.msra.mxu0 0
    %1233 = vmatprep.mubr.bf16.mxu0 0
    %1234 = vmatmul.mubr.bf16.gmra.mrb[0].mxu0 %v1200
    %v1235 = vpop.f32.mrb[0].mxu0
    %v1236 = vadd.f32 0.0, %v1235
    %v1237 = vpop.f32.mrb[0].mxu0
    %v1238 = vpop.f32.mrb[0].mxu0
    %v1239 = vpop.f32.mrb[0].mxu0
    %1240 = vdwg.mxu0
    %v1241 = vadd.f32 %v1199, %v1236
    %v1242 = vtanh.pop %v1241
    %s1243 = scalar_lea.vmem %s16, 40
    %1244 = vst [vmem:[%s1243] sm:$0xff] %v1242
    %v1245 = vadd.f32 %v843, %v902
    %v1246 = vpack.c.bf16 %v1242, %v1242
    %1247 = vmatprep.subr.bf16.mxu0 0
    %1248 = vmatpush1.bf16.msra.mxu0 %v956
    %1249 = vmatprep.subr.bf16.mxu0 0
    %1250 = vmatpush1.bf16.msra.mxu0 %v957
    %1251 = vmatprep.subr.bf16.mxu0 0
    %1252 = vmatpush1.bf16.msra.mxu0 %v958
    %1253 = vmatprep.subr.bf16.mxu0 0
    %1254 = vmatpush1.bf16.msra.mxu0 %v959
    %1255 = vmatprep.subr.bf16.mxu0 0
    %1256 = vmatpush1.bf16.msra.mxu0 %v960
    %1257 = vmatprep.subr.bf16.mxu0 0
    %1258 = vmatpush1.bf16.msra.mxu0 %v961
    %1259 = vmatprep.subr.bf16.mxu0 0
    %1260 = vmatpush1.bf16.msra.mxu0 %v962
    %1261 = vmatprep.subr.bf16.mxu0 0
    %1262 = vmatpush1.bf16.msra.mxu0 %v963
    %1263 = vmatprep.subr.bf16.mxu0 0
    %1264 = vmatpush1.bf16.msra.mxu0 0
    %1265 = vmatprep.subr.bf16.mxu0 0
    %1266 = vmatpush1.bf16.msra.mxu0 0
    %1267 = vmatprep.subr.bf16.mxu0 0
    %1268 = vmatpush1.bf16.msra.mxu0 0
    %1269 = vmatprep.subr.bf16.mxu0 0
    %1270 = vmatpush1.bf16.msra.mxu0 0
    %1271 = vmatprep.subr.bf16.mxu0 0
    %1272 = vmatpush1.bf16.msra.mxu0 0
    %1273 = vmatprep.subr.bf16.mxu0 0
    %1274 = vmatpush1.bf16.msra.mxu0 0
    %1275 = vmatprep.subr.bf16.mxu0 0
    %1276 = vmatpush1.bf16.msra.mxu0 0
    %1277 = vmatprep.subr.bf16.mxu0 0
    %1278 = vmatpush1.bf16.msra.mxu0 0
    %1279 = vmatprep.mubr.bf16.mxu0 0
    %1280 = vmatmul.mubr.bf16.gmra.mrb[0].mxu0 %v1246
    %v1281 = vpop.f32.mrb[0].mxu0
    %v1282 = vadd.f32 0.0, %v1281
    %v1283 = vpop.f32.mrb[0].mxu0
    %v1284 = vpop.f32.mrb[0].mxu0
    %v1285 = vpop.f32.mrb[0].mxu0
    %1286 = vdwg.mxu0
    %v1287 = vadd.f32 %v1245, %v1282
    %v1288 = vtanh.pop %v1287
    %s1289 = scalar_lea.vmem %s16, 48
    %1290 = vst [vmem:[%s1289] sm:$0xff] %v1288
    %v1291 = vadd.f32 %v846, %v902
    %v1292 = vpack.c.bf16 %v1288, %v1288
    %1293 = vmatprep.subr.bf16.mxu0 0
    %1294 = vmatpush1.bf16.msra.mxu0 %v956
    %1295 = vmatprep.subr.bf16.mxu0 0
    %1296 = vmatpush1.bf16.msra.mxu0 %v957
    %1297 = vmatprep.subr.bf16.mxu0 0
    %1298 = vmatpush1.bf16.msra.mxu0 %v958
    %1299 = vmatprep.subr.bf16.mxu0 0
    %1300 = vmatpush1.bf16.msra.mxu0 %v959
    %1301 = vmatprep.subr.bf16.mxu0 0
    %1302 = vmatpush1.bf16.msra.mxu0 %v960
    %1303 = vmatprep.subr.bf16.mxu0 0
    %1304 = vmatpush1.bf16.msra.mxu0 %v961
    %1305 = vmatprep.subr.bf16.mxu0 0
    %1306 = vmatpush1.bf16.msra.mxu0 %v962
    %1307 = vmatprep.subr.bf16.mxu0 0
    %1308 = vmatpush1.bf16.msra.mxu0 %v963
    %1309 = vmatprep.subr.bf16.mxu0 0
    %1310 = vmatpush1.bf16.msra.mxu0 0
    %1311 = vmatprep.subr.bf16.mxu0 0
    %1312 = vmatpush1.bf16.msra.mxu0 0
    %1313 = vmatprep.subr.bf16.mxu0 0
    %1314 = vmatpush1.bf16.msra.mxu0 0
    %1315 = vmatprep.subr.bf16.mxu0 0
    %1316 = vmatpush1.bf16.msra.mxu0 0
    %1317 = vmatprep.subr.bf16.mxu0 0
    %1318 = vmatpush1.bf16.msra.mxu0 0
    %1319 = vmatprep.subr.bf16.mxu0 0
    %1320 = vmatpush1.bf16.msra.mxu0 0
    %1321 = vmatprep.subr.bf16.mxu0 0
    %1322 = vmatpush1.bf16.msra.mxu0 0
    %1323 = vmatprep.subr.bf16.mxu0 0
    %1324 = vmatpush1.bf16.msra.mxu0 0
    %1325 = vmatprep.mubr.bf16.mxu0 0
    %1326 = vmatmul.mubr.bf16.gmra.mrb[0].mxu0 %v1292
    %v1327 = vpop.f32.mrb[0].mxu0
    %v1328 = vadd.f32 0.0, %v1327
    %v1329 = vpop.f32.mrb[0].mxu0
    %v1330 = vpop.f32.mrb[0].mxu0
    %v1331 = vpop.f32.mrb[0].mxu0
    %1332 = vdwg.mxu0
    %v1333 = vadd.f32 %v1291, %v1328
    %v1334 = vtanh.pop %v1333
    %s1335 = scalar_lea.vmem %s16, 56
    %1336 = vst [vmem:[%s1335] sm:$0xff] %v1334
    %v1337 = vpack.c.bf16 %v1334, %v1334
    %v1338 = vld [vmem:[#allocation21] sm:$0xf]
    %v1339 = vld [vmem:[#allocation21 + $0x4] sm:$0xf]
    %v1340 = vld [vmem:[#allocation21 + $0x8] sm:$0xf]
    %v1341 = vld [vmem:[#allocation21 + $0xc] sm:$0xf]
    %v1342 = vld [vmem:[#allocation21 + $0x10] sm:$0xf]
    %v1343 = vld [vmem:[#allocation21 + $0x14] sm:$0xf]
    %v1344 = vld [vmem:[#allocation21 + $0x18] sm:$0xf]
    %v1345 = vld [vmem:[#allocation21 + $0x1c] sm:$0xf]
    %v1346 = vld [vmem:[#allocation21 + $0x20] sm:$0xf]
    %v1347 = vld [vmem:[#allocation21 + $0x24] sm:$0xf]
    %v1348 = vld [vmem:[#allocation21 + $0x28] sm:$0xf]
    %v1349 = vld [vmem:[#allocation21 + $0x2c] sm:$0xf]
    %v1350 = vld [vmem:[#allocation21 + $0x30] sm:$0xf]
    %v1351 = vld [vmem:[#allocation21 + $0x34] sm:$0xf]
    %v1352 = vld [vmem:[#allocation21 + $0x38] sm:$0xf]
    %v1353 = vld [vmem:[#allocation21 + $0x3c] sm:$0xf]
    %v1354 = vld [vmem:[#allocation22] sm:$0x1]
    %v1356 = vlaneseq
    %v1357 = vshrl.u32 %v1356, 7
    %v1358 = vsub.s32 0, %v1357
    %v1359 = vrot.slane %v1354, %v1358
    %v1377 = vunpack.c.l.b16 %v1338
    %v1378 = vunpack.c.l.b16 %v1339
    %v1379 = vunpack.c.l.b16 %v1340
    %v1380 = vunpack.c.l.b16 %v1341
    %v1381 = vunpack.c.l.b16 %v1342
    %v1382 = vunpack.c.l.b16 %v1343
    %v1383 = vunpack.c.l.b16 %v1344
    %v1384 = vunpack.c.l.b16 %v1345
    %v1385 = vunpack.c.l.b16 %v1346
    %v1386 = vunpack.c.l.b16 %v1347
    %v1387 = vunpack.c.l.b16 %v1348
    %v1388 = vunpack.c.l.b16 %v1349
    %v1389 = vunpack.c.l.b16 %v1350
    %v1390 = vunpack.c.l.b16 %v1351
    %v1391 = vunpack.c.l.b16 %v1352
    %v1392 = vunpack.c.l.b16 %v1353
    %v1393 = vpack.c.b16 %v1378, %v1377
    %v1394 = vpack.c.b16 %v1380, %v1379
    %v1395 = vpack.c.b16 %v1382, %v1381
    %v1396 = vpack.c.b16 %v1384, %v1383
    %v1397 = vpack.c.b16 %v1386, %v1385
    %v1398 = vpack.c.b16 %v1388, %v1387
    %v1399 = vpack.c.b16 %v1390, %v1389
    %v1400 = vpack.c.b16 %v1392, %v1391
    %1409 = vmatprep.subr.bf16.mxu0 0
    %1410 = vmatpush1.bf16.msra.mxu0 %v1393
    %1411 = vmatprep.subr.bf16.mxu0 0
    %1412 = vmatpush1.bf16.msra.mxu0 %v1394
    %1413 = vmatprep.subr.bf16.mxu0 0
    %1414 = vmatpush1.bf16.msra.mxu0 %v1395
    %1415 = vmatprep.subr.bf16.mxu0 0
    %1416 = vmatpush1.bf16.msra.mxu0 %v1396
    %1417 = vmatprep.subr.bf16.mxu0 0
    %1418 = vmatpush1.bf16.msra.mxu0 %v1397
    %1419 = vmatprep.subr.bf16.mxu0 0
    %1420 = vmatpush1.bf16.msra.mxu0 %v1398
    %1421 = vmatprep.subr.bf16.mxu0 0
    %1422 = vmatpush1.bf16.msra.mxu0 %v1399
    %1423 = vmatprep.subr.bf16.mxu0 0
    %1424 = vmatpush1.bf16.msra.mxu0 %v1400
    %1425 = vmatprep.subr.bf16.mxu0 0
    %1426 = vmatpush1.bf16.msra.mxu0 0
    %1427 = vmatprep.subr.bf16.mxu0 0
    %1428 = vmatpush1.bf16.msra.mxu0 0
    %1429 = vmatprep.subr.bf16.mxu0 0
    %1430 = vmatpush1.bf16.msra.mxu0 0
    %1431 = vmatprep.subr.bf16.mxu0 0
    %1432 = vmatpush1.bf16.msra.mxu0 0
    %1433 = vmatprep.subr.bf16.mxu0 0
    %1434 = vmatpush1.bf16.msra.mxu0 0
    %1435 = vmatprep.subr.bf16.mxu0 0
    %1436 = vmatpush1.bf16.msra.mxu0 0
    %1437 = vmatprep.subr.bf16.mxu0 0
    %1438 = vmatpush1.bf16.msra.mxu0 0
    %1439 = vmatprep.subr.bf16.mxu0 0
    %1440 = vmatpush1.bf16.msra.mxu0 0
    %1441 = vmatprep.mubr.bf16.mxu0 0
    %1442 = vmatmul.mubr.bf16.gmra.mrb[0].mxu0 %v1337
    %v1443 = vpop.f32.mrb[0].mxu0
    %v1444 = vadd.f32 %v1359, %v1443
    %v1445 = vpop.f32.mrb[0].mxu0
    %v1446 = vpop.f32.mrb[0].mxu0
    %v1447 = vpop.f32.mrb[0].mxu0
    %1448 = vdwg.mxu0
    %1449 = vst [vmem:[%s17] sm:$0xff] %v1444
    // Predicated region
    $region118: #{multitask_finetune_forward.1} parent=1 // pred_check
      _
    $region119: #{multitask_finetune_forward.1} parent=1 // pred_check_branch
      %1451 = sbr.rel (0) target = $region121
    $region120: #{multitask_finetune_forward.1} parent=1 // pred_region
      _
    $region121: #{multitask_finetune_forward.1} parent=1 // pred_fallthru
      _
    // Predicated region
    $region122: #{multitask_finetune_forward.1} parent=1 // pred_check
      _
    $region123: #{multitask_finetune_forward.1} parent=1 // pred_check_branch
      %1453 = sbr.rel (0) target = $region125
    $region124: #{multitask_finetune_forward.1} parent=1 // pred_region
      _
    $region125: #{multitask_finetune_forward.1} parent=1 // pred_fallthru
      _
    // Predicated region
    $region126: #{multitask_finetune_forward.1} parent=1 // pred_check
      _
    $region127: #{multitask_finetune_forward.1} parent=1 // pred_check_branch
      %1455 = sbr.rel (0) target = $region129
    $region128: #{multitask_finetune_forward.1} parent=1 // pred_region
      _
    $region129: #{multitask_finetune_forward.1} parent=1 // pred_fallthru
      _
    // Predicated region
    $region130: #{multitask_finetune_forward.1} parent=1 // pred_check
      _
    $region131: #{multitask_finetune_forward.1} parent=1 // pred_check_branch
      %1457 = sbr.rel (0) target = $region133
    $region132: #{multitask_finetune_forward.1} parent=1 // pred_region
      _
    $region133: #{multitask_finetune_forward.1} parent=1 // pred_fallthru
      _
    // Predicated region
    $region134: #{multitask_finetune_forward.1} parent=1 // pred_check
      _
    $region135: #{multitask_finetune_forward.1} parent=1 // pred_check_branch
      %1459 = sbr.rel (0) target = $region137
    $region136: #{multitask_finetune_forward.1} parent=1 // pred_region
      _
    $region137: #{multitask_finetune_forward.1} parent=1 // pred_fallthru
      _
    // Predicated region
    $region138: #{multitask_finetune_forward.1} parent=1 // pred_check
      _
    $region139: #{multitask_finetune_forward.1} parent=1 // pred_check_branch
      %1461 = sbr.rel (0) target = $region141
    $region140: #{multitask_finetune_forward.1} parent=1 // pred_region
      _
    $region141: #{multitask_finetune_forward.1} parent=1 // pred_fallthru
      _
    %1462 = vsyncpa [#allocation3], 1
    %1463 = vsyncpa [#allocation5], 1
    %1464 = vsyncpa [#allocation8], 1
    %1465 = vsyncpa [#allocation11], 1
    %1466 = vsyncpa [#allocation14], 1
    %1467 = vsyncpa [#allocation17], 1
    %1468 = vsyncpa [#allocation20], 1
    %1469 = vsyncpa [#allocation23], 1

</llo_original>
